<compile_context>
chip_gen: v7x
topology: tpu7x:2x2x1
jax: 0.10.0
libtpu: 0.0.40
codegen_flags: <defaults>
</compile_context>

<pallas_src>
import functools

import jax
import jax.numpy as jnp
from jax import lax
from jax.experimental import pallas as pl
from jax.experimental.pallas import tpu as pltpu

BN_EPS = 1e-5


# --------------------------------------------------------------------------
# Kernels
# --------------------------------------------------------------------------
def _stats0_kernel(x_ref, sum_ref, sumsq_ref):
    """Per-batch-block streaming sum / sum-of-squares of x over the L grid.
    Zero padding along L contributes 0 to both sums, so no mask is needed."""
    @pl.when(pl.program_id(1) == 0)
    def _():
        sum_ref[...] = jnp.zeros_like(sum_ref)
        sumsq_ref[...] = jnp.zeros_like(sumsq_ref)

    xt = x_ref[0].astype(jnp.float32)                       # (size_in, lt)
    sum_ref[0] += jnp.sum(xt, axis=1, keepdims=True)        # (size_in, 1)
    sumsq_ref[0] += jnp.sum(xt * xt, axis=1, keepdims=True)


def _stats1_kernel(x_ref, scale0_ref, shift0_ref, w0t_ref, sum_ref, sumsq_ref,
                   *, lt, l_valid, need_mask):
    """Recompute net0 = fc_0.weight @ relu(bn_0 x) per tile (bias0 folded out;
    variance is shift-invariant, mean corrected in the wrapper) and accumulate
    per-batch-block sum / sum-of-squares.  Pad columns are masked to zero."""
    @pl.when(pl.program_id(1) == 0)
    def _():
        sum_ref[...] = jnp.zeros_like(sum_ref)
        sumsq_ref[...] = jnp.zeros_like(sumsq_ref)

    xt = x_ref[0].astype(jnp.float32)                       # (size_in, lt)
    h0 = jnp.maximum(scale0_ref[...] * xt + shift0_ref[...], 0.0)
    if need_mask:
        col = pl.program_id(1) * lt + lax.broadcasted_iota(jnp.int32, (1, lt), 1)
        h0 = jnp.where(col < l_valid, h0, 0.0)
    net0 = jnp.dot(w0t_ref[...], h0.astype(jnp.bfloat16),   # bf16 MXU, f32 acc
                   preferred_element_type=jnp.float32)      # (size_h, lt)
    sum_ref[0] += jnp.sum(net0, axis=1, keepdims=True)
    sumsq_ref[0] += jnp.sum(net0 * net0, axis=1, keepdims=True)


def _apply_kernel(*refs, has_shortcut):
    """out = shortcut(x) + fc_1(relu(bn_1(fc_0(relu(bn_0 x))))) + fc_c(c)."""
    if has_shortcut:
        (x_ref, c_ref, scale0_ref, shift0_ref, w0s_ref, shift1p_ref,
         w1t_ref, wct_ref, wst_ref, bsum_ref, out_ref) = refs
    else:
        (x_ref, c_ref, scale0_ref, shift0_ref, w0s_ref, shift1p_ref,
         w1t_ref, wct_ref, bsum_ref, out_ref) = refs

    xt = x_ref[0].astype(jnp.float32)                       # (size_in, lt)
    h0 = jnp.maximum(scale0_ref[...] * xt + shift0_ref[...], 0.0)
    # bn_1 scale is folded into the fc_0 weight rows; shift1' = b1 - scale1*mean(net0)
    h1 = jnp.maximum(
        jnp.dot(w0s_ref[...], h0.astype(jnp.bfloat16),
                preferred_element_type=jnp.float32) + shift1p_ref[...], 0.0)

    # Epilogue: separate accumulated MXU dots (no concat materialization).
    out = jnp.dot(w1t_ref[...], h1.astype(jnp.bfloat16),
                  preferred_element_type=jnp.float32)
    out = out + jnp.dot(wct_ref[...], c_ref[0].astype(jnp.bfloat16),
                        preferred_element_type=jnp.float32)
    if has_shortcut:
        out = out + jnp.dot(wst_ref[...], xt.astype(jnp.bfloat16),
                            preferred_element_type=jnp.float32)
    else:
        out = out + xt                                       # exact f32 residual
    out_ref[0] = (out + bsum_ref[...]).astype(out_ref.dtype)


# --------------------------------------------------------------------------
# VMEM budget / tile sizing (generation-aware)
# --------------------------------------------------------------------------
def _vmem_config():
    cap = 128 << 20
    try:
        info = pltpu.get_tpu_info()
        cap = int(getattr(info, "vmem_capacity_bytes", cap)) or cap
    except Exception:
        pass
    if cap <= (64 << 20):                       # v7x-class: 64 MiB VMEM per TC
        budget = max(min(48 << 20, cap - (12 << 20)), 24 << 20)
        lt_cap = 2048
    else:                                       # v5e / v6e: 128 MiB VMEM
        budget = min(100 << 20, int(cap * 0.78))
        lt_cap = 8192
    return budget, lt_cap


def _vmem_estimate(lt, size_in, size_h, size_out, c_dim, in_bytes, out_bytes):
    # Double-buffered streamed tiles (x, c in; out).
    stream = 2 * lt * (in_bytes * (size_in + c_dim) + out_bytes * size_out)
    # In-kernel f32 intermediates + bf16 MXU-operand copies (apply pass is fattest).
    interm = lt * (4 * (size_in + c_dim + 2 * size_h + size_out)
                   + 2 * (size_in + c_dim + size_h))
    weights = 8 * (size_h * size_in + size_out * (size_h + size_in + c_dim))
    return stream + interm + weights + (2 << 20)            # headroom


def _pick_l_tile(l_pad, size_in, size_h, size_out, c_dim, in_bytes, out_bytes,
                 vmem_budget, lt_cap):
    """Largest multiple-of-128 divisor of l_pad within the VMEM budget and cap."""
    best = 128
    t = 128
    while t <= min(l_pad, lt_cap):
        if l_pad % t == 0 and _vmem_estimate(
                t, size_in, size_h, size_out, c_dim, in_bytes, out_bytes) <= vmem_budget:
            best = t
        t += 128
    return best


# --------------------------------------------------------------------------
# Wrapper
# --------------------------------------------------------------------------
def resnet_block_conv1d(x, c, params):
    """x: (B, size_in, L), c: (B, c_dim, L) -> (B, size_out, L)   (NCL layout).
    Training-mode BatchNorm1d (global batch statistics over B*L)."""
    B, size_in, L = x.shape
    _, c_dim, _ = c.shape
    size_h = params["w0"].shape[1]
    size_out = params["w1"].shape[1]
    has_shortcut = params.get("ws") is not None
    M = B * L

    # --- pad L to a multiple of 128 (lane-dense stores, keeps pipelining) ----
    l_pad = ((L + 127) // 128) * 128
    if l_pad != L:
        x_p = jnp.pad(x, ((0, 0), (0, 0), (0, l_pad - L)))
        c_p = jnp.pad(c, ((0, 0), (0, 0), (0, l_pad - L)))
    else:
        x_p, c_p = x, c

    vmem_budget, lt_cap = _vmem_config()
    in_bytes = max(x.dtype.itemsize, c.dtype.itemsize)
    lt = _pick_l_tile(l_pad, size_in, size_h, size_out, c_dim,
                      in_bytes, x.dtype.itemsize, vmem_budget, lt_cap)
    grid = (B, l_pad // lt)

    def tile_spec(ch):                       # (1, ch, lt) tile over (B, ch, L)
        return pl.BlockSpec((1, ch, lt), lambda b, l: (b, 0, l))

    def const_spec(shape):                   # small resident array
        nd = len(shape)
        return pl.BlockSpec(shape, lambda b, l: (0,) * nd)

    def per_b_spec(ch):                      # per-batch partial-sum accumulator
        return pl.BlockSpec((1, ch, 1), lambda b, l: (b, 0, 0))

    def cparams(sem):
        return pltpu.CompilerParams(dimension_semantics=sem,
                                    vmem_limit_bytes=int(vmem_budget))

    # ---- Pass 1: global BN0 statistics of x (B parallel, L reduction) -------
    sum0, sumsq0 = pl.pallas_call(
        _stats0_kernel,
        grid=grid,
        in_specs=[tile_spec(size_in)],
        out_specs=[per_b_spec(size_in), per_b_spec(size_in)],
        out_shape=[jax.ShapeDtypeStruct((B, size_in, 1), jnp.float32)] * 2,
        compiler_params=cparams(("parallel", "arbitrary")),
    )(x_p)
    sum0 = jnp.sum(sum0[:, :, 0], axis=0)
    sumsq0 = jnp.sum(sumsq0[:, :, 0], axis=0)

    mean0 = sum0 / M
    var0 = jnp.maximum(sumsq0 / M - mean0 * mean0, 0.0)
    inv0 = lax.rsqrt(var0 + BN_EPS)
    scale0 = (params["g0"] * inv0)[:, None].astype(jnp.float32)       # (size_in, 1)
    shift0 = (params["b0"] - params["g0"] * inv0 * mean0)[:, None].astype(jnp.float32)

    w0t_f32 = jnp.transpose(params["w0"]).astype(jnp.float32)         # (size_h, size_in)
    w0t_bf16 = w0t_f32.astype(jnp.bfloat16)

    # ---- Pass 2: global BN1 statistics of net0 (bias0 folded out) -----------
    stats1 = functools.partial(_stats1_kernel, lt=lt, l_valid=L,
                               need_mask=(l_pad != L))
    sum1, sumsq1 = pl.pallas_call(
        stats1,
        grid=grid,
        in_specs=[tile_spec(size_in),
                  const_spec((size_in, 1)), const_spec((size_in, 1)),
                  const_spec((size_h, size_in))],
        out_specs=[per_b_spec(size_h), per_b_spec(size_h)],
        out_shape=[jax.ShapeDtypeStruct((B, size_h, 1), jnp.float32)] * 2,
        compiler_params=cparams(("parallel", "arbitrary")),
    )(x_p, scale0, shift0, w0t_bf16)
    sum1 = jnp.sum(sum1[:, :, 0], axis=0)
    sumsq1 = jnp.sum(sumsq1[:, :, 0], axis=0)

    mean_net0 = sum1 / M                                   # mean of net before bias0
    var1 = jnp.maximum(sumsq1 / M - mean_net0 * mean_net0, 0.0)   # shift-invariant
    inv1 = lax.rsqrt(var1 + BN_EPS)
    scale1 = params["g1"] * inv1
    # relu(scale1*(net0 + bias0) + b1 - scale1*(mean_net0 + bias0))
    #   = relu((scale1 * w0t) @ h0 + (b1 - scale1*mean_net0))
    shift1p = (params["b1"] - scale1 * mean_net0)[:, None].astype(jnp.float32)
    w0s = (scale1[:, None] * w0t_f32).astype(jnp.bfloat16)            # (size_h, size_in)

    w1t = jnp.transpose(params["w1"]).astype(jnp.bfloat16)            # (size_out, size_h)
    wct = jnp.transpose(params["wc"]).astype(jnp.bfloat16)            # (size_out, c_dim)
    bsum = (params["bias1"] + params["biasc"])[:, None].astype(jnp.float32)

    in_specs = [tile_spec(size_in), tile_spec(c_dim),
                const_spec((size_in, 1)), const_spec((size_in, 1)),
                const_spec((size_h, size_in)), const_spec((size_h, 1)),
                const_spec((size_out, size_h)), const_spec((size_out, c_dim))]
    args = [x_p, c_p, scale0, shift0, w0s, shift1p, w1t, wct]
    if has_shortcut:
        wst = jnp.transpose(params["ws"]).astype(jnp.bfloat16)        # (size_out, size_in)
        in_specs.append(const_spec((size_out, size_in)))
        args.append(wst)
    in_specs.append(const_spec((size_out, 1)))
    args.append(bsum)

    # ---- Pass 3: normalize + fused epilogue (fully parallel) ----------------
    out = pl.pallas_call(
        functools.partial(_apply_kernel, has_shortcut=has_shortcut),
        grid=grid,
        in_specs=in_specs,
        out_specs=tile_spec(size_out),
        out_shape=jax.ShapeDtypeStruct((B, size_out, l_pad), x.dtype),
        compiler_params=cparams(("parallel", "parallel")),
    )(*args)

    return out[:, :, :L] if l_pad != L else out


# --------------------------------------------------------------------------
# Pure-JAX reference (f32, mirrors PyTorch training-mode forward)
# --------------------------------------------------------------------------
def reference(x, c, p):
    def bn(v, g, b):
        mean = jnp.mean(v, axis=(0, 2), keepdims=True)
        var = jnp.mean((v - mean) ** 2, axis=(0, 2), keepdims=True)
        return g[None, :, None] * (v - mean) * lax.rsqrt(var + BN_EPS) + b[None, :, None]

    def conv1x1(v, w, b=None):  # w: (C_in, C_out)
        y = jnp.einsum("bil,io->bol", v, w)
        if b is not None:
            y = y + b[None, :, None]
        return y

    net = conv1x1(jax.nn.relu(bn(x, p["g0"], p["b0"])), p["w0"], p["bias0"])
    dx = conv1x1(jax.nn.relu(bn(net, p["g1"], p["b1"])), p["w1"], p["bias1"])
    x_s = conv1x1(x, p["ws"]) if p.get("ws") is not None else x
    return x_s + dx + conv1x1(c, p["wc"], p["biasc"])


if __name__ == "__main__":
    def make_params(key, c_dim, size_in, size_h, size_out, with_shortcut):
        ks = jax.random.split(key, 10)

        def init_w(k, fan_in, fan_out):
            bound = 1.0 / jnp.sqrt(fan_in)
            return jax.random.uniform(k, (fan_in, fan_out), jnp.float32, -bound, bound)

        p = {
            "g0": 1.0 + 0.1 * jax.random.normal(ks[0], (size_in,), jnp.float32),
            "b0": 0.1 * jax.random.normal(ks[1], (size_in,), jnp.float32),
            "g1": 1.0 + 0.1 * jax.random.normal(ks[2], (size_h,), jnp.float32),
            "b1": 0.1 * jax.random.normal(ks[3], (size_h,), jnp.float32),
            "w0": init_w(ks[4], size_in, size_h),
            "bias0": 0.05 * jax.random.normal(ks[5], (size_h,), jnp.float32),
            # fc_1 weight zero-initialized per nn.init.zeros_(self.fc_1.weight)
            "w1": jnp.zeros((size_h, size_out), jnp.float32),
            "bias1": 0.05 * jax.random.normal(ks[6], (size_out,), jnp.float32),
            "wc": init_w(ks[7], c_dim, size_out),
            "biasc": 0.05 * jax.random.normal(ks[8], (size_out,), jnp.float32),
        }
        if with_shortcut:
            p["ws"] = init_w(ks[9], size_in, size_out)   # bias=False
        return p

    key = jax.random.PRNGKey(0)
    fwd = jax.jit(resnet_block_conv1d)

    # Case 1: size_in != size_out (Conv1d shortcut), L not a multiple of 128
    # -> exercises the pad + stats-mask path.
    k1, k2, key = jax.random.split(key, 3)
    p1 = make_params(k1, c_dim=8, size_in=16, size_h=32, size_out=24, with_shortcut=True)
    x1 = jax.random.normal(jax.random.fold_in(k2, 0), (2, 16, 16), jnp.float32)
    c1 = jax.random.normal(jax.random.fold_in(k2, 1), (2, 8, 16), jnp.float32)
    out1 = jax.block_until_ready(fwd(x1, c1, p1))
    ref1 = reference(x1, c1, p1)
    assert out1.shape == (2, 24, 16)
    # bf16 MXU operands -> tolerance loosened vs the f32 reference.
    assert jnp.allclose(out1, ref1, atol=3e-2, rtol=3e-2), "case1 mismatch vs reference"

    # Case 2: size_in == size_out (identity shortcut, exact f32 residual),
    # L a multiple of 128 -> no padding path.
    k3, k4 = jax.random.split(key)
    p2 = make_params(k3, c_dim=8, size_in=16, size_h=32, size_out=16, with_shortcut=False)
    x2 = jax.random.normal(jax.random.fold_in(k4, 0), (2, 16, 256), jnp.float32)
    c2 = jax.random.normal(jax.random.fold_in(k4, 1), (2, 8, 256), jnp.float32)
    out2 = jax.block_until_ready(fwd(x2, c2, p2))
    ref2 = reference(x2, c2, p2)
    assert out2.shape == (2, 16, 256)
    assert jnp.allclose(out2, ref2, atol=3e-2, rtol=3e-2), "case2 mismatch vs reference"

    print("KERNEL_OK")
</pallas_src>

<mosaic_0001>
module attributes {stable_mosaic.version = 11 : i64} {
  func.func @_stats0_kernel(%arg0: i32, %arg1: i32, %arg2: memref<1x16x128xf32, #tpu.memory_space<vmem>>, %arg3: memref<1x16x1xf32, #tpu.memory_space<vmem>>, %arg4: memref<1x16x1xf32, #tpu.memory_space<vmem>>) attributes {dimension_semantics = [#tpu.dimension_semantics<parallel>, #tpu.dimension_semantics<arbitrary>], iteration_bounds = array<i64: 2, 1>, scalar_prefetch = 0 : i64, scratch_operands = 0 : i64, tpu.core_type = #tpu.core_type<tc>, window_params = [{transform_indices = @transform_0, window_bounds = array<i64: 1, 16, 128>}, {transform_indices = @transform_1, window_bounds = array<i64: 1, 16, 1>}, {transform_indices = @transform_2, window_bounds = array<i64: 1, 16, 1>}]} {
    %c0_i32 = arith.constant 0 : i32
    %0 = arith.cmpi eq, %arg1, %c0_i32 : i32
    %1 = arith.extui %0 : i1 to i32
    %c0_i32_0 = arith.constant 0 : i32
    %2 = arith.cmpi ne, %1, %c0_i32_0 : i32
    scf.if %2 {
      %cst_16 = arith.constant 0.000000e+00 : f32
      %22 = vector.broadcast %cst_16 : f32 to vector<1x16x1xf32>
      %c0_17 = arith.constant 0 : index
      %c0_18 = arith.constant 0 : index
      %c0_19 = arith.constant 0 : index
      %23 = vector.load %arg3[%c0_17, %c0_18, %c0_19] : memref<1x16x1xf32, #tpu.memory_space<vmem>>, vector<1x16x1xf32>
      tpu.vector_store %arg3[%c0_17, %c0_18, %c0_19], %22 {strides = array<i32>} : memref<1x16x1xf32, #tpu.memory_space<vmem>>, vector<1x16x1xf32>,
      %cst_20 = arith.constant 0.000000e+00 : f32
      %24 = vector.broadcast %cst_20 : f32 to vector<1x16x1xf32>
      %c0_21 = arith.constant 0 : index
      %c0_22 = arith.constant 0 : index
      %c0_23 = arith.constant 0 : index
      %25 = vector.load %arg4[%c0_21, %c0_22, %c0_23] : memref<1x16x1xf32, #tpu.memory_space<vmem>>, vector<1x16x1xf32>
      tpu.vector_store %arg4[%c0_21, %c0_22, %c0_23], %24 {strides = array<i32>} : memref<1x16x1xf32, #tpu.memory_space<vmem>>, vector<1x16x1xf32>,
    } else {
    }
    %c0 = arith.constant 0 : index
    %c0_1 = arith.constant 0 : index
    %c0_2 = arith.constant 0 : index
    %3 = vector.load %arg2[%c0, %c0_1, %c0_2] : memref<1x16x128xf32, #tpu.memory_space<vmem>>, vector<1x16x128xf32>
    %4 = vector.shape_cast %3 : vector<1x16x128xf32> to vector<16x128xf32>
    %c0_3 = arith.constant 0 : index
    %c0_4 = arith.constant 0 : index
    %c0_5 = arith.constant 0 : index
    %5 = vector.load %arg3[%c0_3, %c0_4, %c0_5] : memref<1x16x1xf32, #tpu.memory_space<vmem>>, vector<1x16x1xf32>
    %6 = vector.shape_cast %5 : vector<1x16x1xf32> to vector<16x1xf32>
    %cst = arith.constant dense<0.000000e+00> : vector<16xf32>
    %7 = vector.multi_reduction <add>, %4, %cst [1] : vector<16x128xf32> to vector<16xf32>
    %8 = vector.shape_cast %7 : vector<16xf32> to vector<16x1xf32>
    %9 = arith.addf %6, %8 : vector<16x1xf32>
    %c0_6 = arith.constant 0 : index
    %c0_7 = arith.constant 0 : index
    %c0_8 = arith.constant 0 : index
    %10 = vector.load %arg3[%c0_6, %c0_7, %c0_8] : memref<1x16x1xf32, #tpu.memory_space<vmem>>, vector<1x16x1xf32>
    %11 = vector.shape_cast %10 : vector<1x16x1xf32> to vector<16x1xf32>
    %12 = vector.shape_cast %9 : vector<16x1xf32> to vector<1x16x1xf32>
    tpu.vector_store %arg3[%c0_6, %c0_7, %c0_8], %12 {strides = array<i32>} : memref<1x16x1xf32, #tpu.memory_space<vmem>>, vector<1x16x1xf32>,
    %c0_9 = arith.constant 0 : index
    %c0_10 = arith.constant 0 : index
    %c0_11 = arith.constant 0 : index
    %13 = vector.load %arg4[%c0_9, %c0_10, %c0_11] : memref<1x16x1xf32, #tpu.memory_space<vmem>>, vector<1x16x1xf32>
    %14 = vector.shape_cast %13 : vector<1x16x1xf32> to vector<16x1xf32>
    %15 = arith.mulf %4, %4 : vector<16x128xf32>
    %cst_12 = arith.constant dense<0.000000e+00> : vector<16xf32>
    %16 = vector.multi_reduction <add>, %15, %cst_12 [1] : vector<16x128xf32> to vector<16xf32>
    %17 = vector.shape_cast %16 : vector<16xf32> to vector<16x1xf32>
    %18 = arith.addf %14, %17 : vector<16x1xf32>
    %c0_13 = arith.constant 0 : index
    %c0_14 = arith.constant 0 : index
    %c0_15 = arith.constant 0 : index
    %19 = vector.load %arg4[%c0_13, %c0_14, %c0_15] : memref<1x16x1xf32, #tpu.memory_space<vmem>>, vector<1x16x1xf32>
    %20 = vector.shape_cast %19 : vector<1x16x1xf32> to vector<16x1xf32>
    %21 = vector.shape_cast %18 : vector<16x1xf32> to vector<1x16x1xf32>
    tpu.vector_store %arg4[%c0_13, %c0_14, %c0_15], %21 {strides = array<i32>} : memref<1x16x1xf32, #tpu.memory_space<vmem>>, vector<1x16x1xf32>,
    return
  }
  func.func @transform_0(%arg0: i32, %arg1: i32) -> (i32, i32, i32) {
    %c0_i32 = arith.constant 0 : i32
    %c0_i32_0 = arith.constant 0 : i32
    return %arg0, %c0_i32, %arg1 : i32, i32, i32
  }
  func.func @transform_1(%arg0: i32, %arg1: i32) -> (i32, i32, i32) {
    %c0_i32 = arith.constant 0 : i32
    %c0_i32_0 = arith.constant 0 : i32
    %c0_i32_1 = arith.constant 0 : i32
    return %arg0, %c0_i32, %c0_i32_0 : i32, i32, i32
  }
  func.func @transform_2(%arg0: i32, %arg1: i32) -> (i32, i32, i32) {
    %c0_i32 = arith.constant 0 : i32
    %c0_i32_0 = arith.constant 0 : i32
    %c0_i32_1 = arith.constant 0 : i32
    return %arg0, %c0_i32, %c0_i32_0 : i32, i32, i32
  }
}

module attributes {stable_mosaic.version = 11 : i64} {
  func.func @_stats1_kernel(%arg0: i32, %arg1: i32, %arg2: memref<1x16x128xf32, #tpu.memory_space<vmem>>, %arg3: memref<16x1xf32, #tpu.memory_space<vmem>>, %arg4: memref<16x1xf32, #tpu.memory_space<vmem>>, %arg5: memref<32x16xbf16, #tpu.memory_space<vmem>>, %arg6: memref<1x32x1xf32, #tpu.memory_space<vmem>>, %arg7: memref<1x32x1xf32, #tpu.memory_space<vmem>>) attributes {dimension_semantics = [#tpu.dimension_semantics<parallel>, #tpu.dimension_semantics<arbitrary>], iteration_bounds = array<i64: 2, 1>, scalar_prefetch = 0 : i64, scratch_operands = 0 : i64, tpu.core_type = #tpu.core_type<tc>, window_params = [{transform_indices = @transform_0, window_bounds = array<i64: 1, 16, 128>}, {pipeline_mode = #tpu.pipeline_mode<synchronous>, transform_indices = @transform_1, window_bounds = array<i64: 16, 1>}, {pipeline_mode = #tpu.pipeline_mode<synchronous>, transform_indices = @transform_2, window_bounds = array<i64: 16, 1>}, {pipeline_mode = #tpu.pipeline_mode<synchronous>, transform_indices = @transform_3, window_bounds = array<i64: 32, 16>}, {transform_indices = @transform_4, window_bounds = array<i64: 1, 32, 1>}, {transform_indices = @transform_5, window_bounds = array<i64: 1, 32, 1>}]} {
    %c0_i32 = arith.constant 0 : i32
    %0 = arith.cmpi eq, %arg1, %c0_i32 : i32
    %1 = arith.extui %0 : i1 to i32
    %c0_i32_0 = arith.constant 0 : i32
    %2 = arith.cmpi ne, %1, %c0_i32_0 : i32
    scf.if %2 {
      %cst_25 = arith.constant 0.000000e+00 : f32
      %43 = vector.broadcast %cst_25 : f32 to vector<1x32x1xf32>
      %c0_26 = arith.constant 0 : index
      %c0_27 = arith.constant 0 : index
      %c0_28 = arith.constant 0 : index
      %44 = vector.load %arg6[%c0_26, %c0_27, %c0_28] : memref<1x32x1xf32, #tpu.memory_space<vmem>>, vector<1x32x1xf32>
      tpu.vector_store %arg6[%c0_26, %c0_27, %c0_28], %43 {strides = array<i32>} : memref<1x32x1xf32, #tpu.memory_space<vmem>>, vector<1x32x1xf32>,
      %cst_29 = arith.constant 0.000000e+00 : f32
      %45 = vector.broadcast %cst_29 : f32 to vector<1x32x1xf32>
      %c0_30 = arith.constant 0 : index
      %c0_31 = arith.constant 0 : index
      %c0_32 = arith.constant 0 : index
      %46 = vector.load %arg7[%c0_30, %c0_31, %c0_32] : memref<1x32x1xf32, #tpu.memory_space<vmem>>, vector<1x32x1xf32>
      tpu.vector_store %arg7[%c0_30, %c0_31, %c0_32], %45 {strides = array<i32>} : memref<1x32x1xf32, #tpu.memory_space<vmem>>, vector<1x32x1xf32>,
    } else {
    }
    %c0 = arith.constant 0 : index
    %c0_1 = arith.constant 0 : index
    %c0_2 = arith.constant 0 : index
    %3 = vector.load %arg2[%c0, %c0_1, %c0_2] : memref<1x16x128xf32, #tpu.memory_space<vmem>>, vector<1x16x128xf32>
    %4 = vector.shape_cast %3 : vector<1x16x128xf32> to vector<16x128xf32>
    %c0_3 = arith.constant 0 : index
    %c0_4 = arith.constant 0 : index
    %5 = vector.load %arg3[%c0_3, %c0_4] : memref<16x1xf32, #tpu.memory_space<vmem>>, vector<16x1xf32>
    %6 = vector.broadcast %5 : vector<16x1xf32> to vector<16x128xf32>
    %7 = arith.mulf %6, %4 : vector<16x128xf32>
    %c0_5 = arith.constant 0 : index
    %c0_6 = arith.constant 0 : index
    %8 = vector.load %arg4[%c0_5, %c0_6] : memref<16x1xf32, #tpu.memory_space<vmem>>, vector<16x1xf32>
    %9 = vector.broadcast %8 : vector<16x1xf32> to vector<16x128xf32>
    %10 = arith.addf %7, %9 : vector<16x128xf32>
    %cst = arith.constant 0.000000e+00 : f32
    %11 = vector.broadcast %cst : f32 to vector<16x128xf32>
    %12 = arith.maximumf %10, %11 : vector<16x128xf32>
    %c128_i32 = arith.constant 128 : i32
    %13 = arith.muli %arg1, %c128_i32 : i32
    %14 = tpu.iota {dimensions = array<i32: 1>} : vector<1x128xi32>
    %15 = vector.broadcast %13 : i32 to vector<1x128xi32>
    %16 = arith.addi %15, %14 : vector<1x128xi32>
    %c16_i32 = arith.constant 16 : i32
    %17 = vector.broadcast %c16_i32 : i32 to vector<1x128xi32>
    %18 = arith.cmpi slt, %16, %17 : vector<1x128xi32>
    %cst_7 = arith.constant 0.000000e+00 : f32
    %19 = vector.shape_cast %18 : vector<1x128xi1> to vector<1x128xi1>
    %20 = vector.broadcast %19 : vector<1x128xi1> to vector<16x128xi1>
    %21 = vector.broadcast %cst_7 : f32 to vector<16x128xf32>
    %22 = arith.select %20, %12, %21 : vector<16x128xi1>, vector<16x128xf32>
    %c0_8 = arith.constant 0 : index
    %c0_9 = arith.constant 0 : index
    %23 = vector.load %arg5[%c0_8, %c0_9] : memref<32x16xbf16, #tpu.memory_space<vmem>>, vector<32x16xbf16>
    %24 = arith.truncf %22 : vector<16x128xf32> to vector<16x128xbf16>
    %cst_10 = arith.constant dense<0.000000e+00> : vector<32x128xf32>
    %25 = tpu.matmul %23, %24, %cst_10 {dimension_numbers = #tpu.dot_dimension_numbers<[1], [0], [0], [1], [0, 0, 1, 1], [], []>} : vector<32x16xbf16>, vector<16x128xbf16>, vector<32x128xf32> -> vector<32x128xf32>
    %c0_11 = arith.constant 0 : index
    %c0_12 = arith.constant 0 : index
    %c0_13 = arith.constant 0 : index
    %26 = vector.load %arg6[%c0_11, %c0_12, %c0_13] : memref<1x32x1xf32, #tpu.memory_space<vmem>>, vector<1x32x1xf32>
    %27 = vector.shape_cast %26 : vector<1x32x1xf32> to vector<32x1xf32>
    %cst_14 = arith.constant dense<0.000000e+00> : vector<32xf32>
    %28 = vector.multi_reduction <add>, %25, %cst_14 [1] : vector<32x128xf32> to vector<32xf32>
    %29 = vector.shape_cast %28 : vector<32xf32> to vector<32x1xf32>
    %30 = arith.addf %27, %29 : vector<32x1xf32>
    %c0_15 = arith.constant 0 : index
    %c0_16 = arith.constant 0 : index
    %c0_17 = arith.constant 0 : index
    %31 = vector.load %arg6[%c0_15, %c0_16, %c0_17] : memref<1x32x1xf32, #tpu.memory_space<vmem>>, vector<1x32x1xf32>
    %32 = vector.shape_cast %31 : vector<1x32x1xf32> to vector<32x1xf32>
    %33 = vector.shape_cast %30 : vector<32x1xf32> to vector<1x32x1xf32>
    tpu.vector_store %arg6[%c0_15, %c0_16, %c0_17], %33 {strides = array<i32>} : memref<1x32x1xf32, #tpu.memory_space<vmem>>, vector<1x32x1xf32>,
    %c0_18 = arith.constant 0 : index
    %c0_19 = arith.constant 0 : index
    %c0_20 = arith.constant 0 : index
    %34 = vector.load %arg7[%c0_18, %c0_19, %c0_20] : memref<1x32x1xf32, #tpu.memory_space<vmem>>, vector<1x32x1xf32>
    %35 = vector.shape_cast %34 : vector<1x32x1xf32> to vector<32x1xf32>
    %36 = arith.mulf %25, %25 : vector<32x128xf32>
    %cst_21 = arith.constant dense<0.000000e+00> : vector<32xf32>
    %37 = vector.multi_reduction <add>, %36, %cst_21 [1] : vector<32x128xf32> to vector<32xf32>
    %38 = vector.shape_cast %37 : vector<32xf32> to vector<32x1xf32>
    %39 = arith.addf %35, %38 : vector<32x1xf32>
    %c0_22 = arith.constant 0 : index
    %c0_23 = arith.constant 0 : index
    %c0_24 = arith.constant 0 : index
    %40 = vector.load %arg7[%c0_22, %c0_23, %c0_24] : memref<1x32x1xf32, #tpu.memory_space<vmem>>, vector<1x32x1xf32>
    %41 = vector.shape_cast %40 : vector<1x32x1xf32> to vector<32x1xf32>
    %42 = vector.shape_cast %39 : vector<32x1xf32> to vector<1x32x1xf32>
    tpu.vector_store %arg7[%c0_22, %c0_23, %c0_24], %42 {strides = array<i32>} : memref<1x32x1xf32, #tpu.memory_space<vmem>>, vector<1x32x1xf32>,
    return
  }
  func.func @transform_0(%arg0: i32, %arg1: i32) -> (i32, i32, i32) {
    %c0_i32 = arith.constant 0 : i32
    %c0_i32_0 = arith.constant 0 : i32
    return %arg0, %c0_i32, %arg1 : i32, i32, i32
  }
  func.func @transform_1(%arg0: i32, %arg1: i32) -> (i32, i32) {
    %c0_i32 = arith.constant 0 : i32
    %c0_i32_0 = arith.constant 0 : i32
    %c0_i32_1 = arith.constant 0 : i32
    return %c0_i32, %c0_i32_0 : i32, i32
  }
  func.func @transform_2(%arg0: i32, %arg1: i32) -> (i32, i32) {
    %c0_i32 = arith.constant 0 : i32
    %c0_i32_0 = arith.constant 0 : i32
    %c0_i32_1 = arith.constant 0 : i32
    return %c0_i32, %c0_i32_0 : i32, i32
  }
  func.func @transform_3(%arg0: i32, %arg1: i32) -> (i32, i32) {
    %c0_i32 = arith.constant 0 : i32
    %c0_i32_0 = arith.constant 0 : i32
    %c0_i32_1 = arith.constant 0 : i32
    return %c0_i32, %c0_i32_0 : i32, i32
  }
  func.func @transform_4(%arg0: i32, %arg1: i32) -> (i32, i32, i32) {
    %c0_i32 = arith.constant 0 : i32
    %c0_i32_0 = arith.constant 0 : i32
    %c0_i32_1 = arith.constant 0 : i32
    return %arg0, %c0_i32, %c0_i32_0 : i32, i32, i32
  }
  func.func @transform_5(%arg0: i32, %arg1: i32) -> (i32, i32, i32) {
    %c0_i32 = arith.constant 0 : i32
    %c0_i32_0 = arith.constant 0 : i32
    %c0_i32_1 = arith.constant 0 : i32
    return %arg0, %c0_i32, %c0_i32_0 : i32, i32, i32
  }
}

module attributes {stable_mosaic.version = 11 : i64} {
  func.func @_apply_kernel(%arg0: i32, %arg1: i32, %arg2: memref<1x16x128xf32, #tpu.memory_space<vmem>>, %arg3: memref<1x8x128xf32, #tpu.memory_space<vmem>>, %arg4: memref<16x1xf32, #tpu.memory_space<vmem>>, %arg5: memref<16x1xf32, #tpu.memory_space<vmem>>, %arg6: memref<32x16xbf16, #tpu.memory_space<vmem>>, %arg7: memref<32x1xf32, #tpu.memory_space<vmem>>, %arg8: memref<24x32xbf16, #tpu.memory_space<vmem>>, %arg9: memref<24x8xbf16, #tpu.memory_space<vmem>>, %arg10: memref<24x16xbf16, #tpu.memory_space<vmem>>, %arg11: memref<24x1xf32, #tpu.memory_space<vmem>>, %arg12: memref<1x24x128xf32, #tpu.memory_space<vmem>>) attributes {dimension_semantics = [#tpu.dimension_semantics<parallel>, #tpu.dimension_semantics<parallel>], iteration_bounds = array<i64: 2, 1>, scalar_prefetch = 0 : i64, scratch_operands = 0 : i64, tpu.core_type = #tpu.core_type<tc>, window_params = [{transform_indices = @transform_0, window_bounds = array<i64: 1, 16, 128>}, {transform_indices = @transform_1, window_bounds = array<i64: 1, 8, 128>}, {pipeline_mode = #tpu.pipeline_mode<synchronous>, transform_indices = @transform_2, window_bounds = array<i64: 16, 1>}, {pipeline_mode = #tpu.pipeline_mode<synchronous>, transform_indices = @transform_3, window_bounds = array<i64: 16, 1>}, {pipeline_mode = #tpu.pipeline_mode<synchronous>, transform_indices = @transform_4, window_bounds = array<i64: 32, 16>}, {pipeline_mode = #tpu.pipeline_mode<synchronous>, transform_indices = @transform_5, window_bounds = array<i64: 32, 1>}, {pipeline_mode = #tpu.pipeline_mode<synchronous>, transform_indices = @transform_6, window_bounds = array<i64: 24, 32>}, {pipeline_mode = #tpu.pipeline_mode<synchronous>, transform_indices = @transform_7, window_bounds = array<i64: 24, 8>}, {pipeline_mode = #tpu.pipeline_mode<synchronous>, transform_indices = @transform_8, window_bounds = array<i64: 24, 16>}, {pipeline_mode = #tpu.pipeline_mode<synchronous>, transform_indices = @transform_9, window_bounds = array<i64: 24, 1>}, {transform_indices = @transform_10, window_bounds = array<i64: 1, 24, 128>}]} {
    %c0 = arith.constant 0 : index
    %c0_0 = arith.constant 0 : index
    %c0_1 = arith.constant 0 : index
    %0 = vector.load %arg2[%c0, %c0_0, %c0_1] : memref<1x16x128xf32, #tpu.memory_space<vmem>>, vector<1x16x128xf32>
    %1 = vector.shape_cast %0 : vector<1x16x128xf32> to vector<16x128xf32>
    %c0_2 = arith.constant 0 : index
    %c0_3 = arith.constant 0 : index
    %2 = vector.load %arg4[%c0_2, %c0_3] : memref<16x1xf32, #tpu.memory_space<vmem>>, vector<16x1xf32>
    %3 = vector.broadcast %2 : vector<16x1xf32> to vector<16x128xf32>
    %4 = arith.mulf %3, %1 : vector<16x128xf32>
    %c0_4 = arith.constant 0 : index
    %c0_5 = arith.constant 0 : index
    %5 = vector.load %arg5[%c0_4, %c0_5] : memref<16x1xf32, #tpu.memory_space<vmem>>, vector<16x1xf32>
    %6 = vector.broadcast %5 : vector<16x1xf32> to vector<16x128xf32>
    %7 = arith.addf %4, %6 : vector<16x128xf32>
    %cst = arith.constant 0.000000e+00 : f32
    %8 = vector.broadcast %cst : f32 to vector<16x128xf32>
    %9 = arith.maximumf %7, %8 : vector<16x128xf32>
    %c0_6 = arith.constant 0 : index
    %c0_7 = arith.constant 0 : index
    %10 = vector.load %arg6[%c0_6, %c0_7] : memref<32x16xbf16, #tpu.memory_space<vmem>>, vector<32x16xbf16>
    %11 = arith.truncf %9 : vector<16x128xf32> to vector<16x128xbf16>
    %cst_8 = arith.constant dense<0.000000e+00> : vector<32x128xf32>
    %12 = tpu.matmul %10, %11, %cst_8 {dimension_numbers = #tpu.dot_dimension_numbers<[1], [0], [0], [1], [0, 0, 1, 1], [], []>} : vector<32x16xbf16>, vector<16x128xbf16>, vector<32x128xf32> -> vector<32x128xf32>
    %c0_9 = arith.constant 0 : index
    %c0_10 = arith.constant 0 : index
    %13 = vector.load %arg7[%c0_9, %c0_10] : memref<32x1xf32, #tpu.memory_space<vmem>>, vector<32x1xf32>
    %14 = vector.broadcast %13 : vector<32x1xf32> to vector<32x128xf32>
    %15 = arith.addf %12, %14 : vector<32x128xf32>
    %cst_11 = arith.constant 0.000000e+00 : f32
    %16 = vector.broadcast %cst_11 : f32 to vector<32x128xf32>
    %17 = arith.maximumf %15, %16 : vector<32x128xf32>
    %c0_12 = arith.constant 0 : index
    %c0_13 = arith.constant 0 : index
    %18 = vector.load %arg8[%c0_12, %c0_13] : memref<24x32xbf16, #tpu.memory_space<vmem>>, vector<24x32xbf16>
    %19 = arith.truncf %17 : vector<32x128xf32> to vector<32x128xbf16>
    %cst_14 = arith.constant dense<0.000000e+00> : vector<24x128xf32>
    %20 = tpu.matmul %18, %19, %cst_14 {dimension_numbers = #tpu.dot_dimension_numbers<[1], [0], [0], [1], [0, 0, 1, 1], [], []>} : vector<24x32xbf16>, vector<32x128xbf16>, vector<24x128xf32> -> vector<24x128xf32>
    %c0_15 = arith.constant 0 : index
    %c0_16 = arith.constant 0 : index
    %21 = vector.load %arg9[%c0_15, %c0_16] : memref<24x8xbf16, #tpu.memory_space<vmem>>, vector<24x8xbf16>
    %c0_17 = arith.constant 0 : index
    %c0_18 = arith.constant 0 : index
    %c0_19 = arith.constant 0 : index
    %22 = vector.load %arg3[%c0_17, %c0_18, %c0_19] : memref<1x8x128xf32, #tpu.memory_space<vmem>>, vector<1x8x128xf32>
    %23 = vector.shape_cast %22 : vector<1x8x128xf32> to vector<8x128xf32>
    %24 = arith.truncf %23 : vector<8x128xf32> to vector<8x128xbf16>
    %cst_20 = arith.constant dense<0.000000e+00> : vector<24x128xf32>
    %25 = tpu.matmul %21, %24, %cst_20 {dimension_numbers = #tpu.dot_dimension_numbers<[1], [0], [0], [1], [0, 0, 1, 1], [], []>} : vector<24x8xbf16>, vector<8x128xbf16>, vector<24x128xf32> -> vector<24x128xf32>
    %26 = arith.addf %20, %25 : vector<24x128xf32>
    %c0_21 = arith.constant 0 : index
    %c0_22 = arith.constant 0 : index
    %27 = vector.load %arg10[%c0_21, %c0_22] : memref<24x16xbf16, #tpu.memory_space<vmem>>, vector<24x16xbf16>
    %28 = arith.truncf %1 : vector<16x128xf32> to vector<16x128xbf16>
    %cst_23 = arith.constant dense<0.000000e+00> : vector<24x128xf32>
    %29 = tpu.matmul %27, %28, %cst_23 {dimension_numbers = #tpu.dot_dimension_numbers<[1], [0], [0], [1], [0, 0, 1, 1], [], []>} : vector<24x16xbf16>, vector<16x128xbf16>, vector<24x128xf32> -> vector<24x128xf32>
    %30 = arith.addf %26, %29 : vector<24x128xf32>
    %c0_24 = arith.constant 0 : index
    %c0_25 = arith.constant 0 : index
    %31 = vector.load %arg11[%c0_24, %c0_25] : memref<24x1xf32, #tpu.memory_space<vmem>>, vector<24x1xf32>
    %32 = vector.broadcast %31 : vector<24x1xf32> to vector<24x128xf32>
    %33 = arith.addf %30, %32 : vector<24x128xf32>
    %c0_26 = arith.constant 0 : index
    %c0_27 = arith.constant 0 : index
    %c0_28 = arith.constant 0 : index
    %34 = vector.load %arg12[%c0_26, %c0_27, %c0_28] : memref<1x24x128xf32, #tpu.memory_space<vmem>>, vector<1x24x128xf32>
    %35 = vector.shape_cast %34 : vector<1x24x128xf32> to vector<24x128xf32>
    %36 = vector.shape_cast %33 : vector<24x128xf32> to vector<1x24x128xf32>
    tpu.vector_store %arg12[%c0_26, %c0_27, %c0_28], %36 {strides = array<i32>} : memref<1x24x128xf32, #tpu.memory_space<vmem>>, vector<1x24x128xf32>,
    return
  }
  func.func @transform_0(%arg0: i32, %arg1: i32) -> (i32, i32, i32) {
    %c0_i32 = arith.constant 0 : i32
    %c0_i32_0 = arith.constant 0 : i32
    return %arg0, %c0_i32, %arg1 : i32, i32, i32
  }
  func.func @transform_1(%arg0: i32, %arg1: i32) -> (i32, i32, i32) {
    %c0_i32 = arith.constant 0 : i32
    %c0_i32_0 = arith.constant 0 : i32
    return %arg0, %c0_i32, %arg1 : i32, i32, i32
  }
  func.func @transform_2(%arg0: i32, %arg1: i32) -> (i32, i32) {
    %c0_i32 = arith.constant 0 : i32
    %c0_i32_0 = arith.constant 0 : i32
    %c0_i32_1 = arith.constant 0 : i32
    return %c0_i32, %c0_i32_0 : i32, i32
  }
  func.func @transform_3(%arg0: i32, %arg1: i32) -> (i32, i32) {
    %c0_i32 = arith.constant 0 : i32
    %c0_i32_0 = arith.constant 0 : i32
    %c0_i32_1 = arith.constant 0 : i32
    return %c0_i32, %c0_i32_0 : i32, i32
  }
  func.func @transform_4(%arg0: i32, %arg1: i32) -> (i32, i32) {
    %c0_i32 = arith.constant 0 : i32
    %c0_i32_0 = arith.constant 0 : i32
    %c0_i32_1 = arith.constant 0 : i32
    return %c0_i32, %c0_i32_0 : i32, i32
  }
  func.func @transform_5(%arg0: i32, %arg1: i32) -> (i32, i32) {
    %c0_i32 = arith.constant 0 : i32
    %c0_i32_0 = arith.constant 0 : i32
    %c0_i32_1 = arith.constant 0 : i32
    return %c0_i32, %c0_i32_0 : i32, i32
  }
  func.func @transform_6(%arg0: i32, %arg1: i32) -> (i32, i32) {
    %c0_i32 = arith.constant 0 : i32
    %c0_i32_0 = arith.constant 0 : i32
    %c0_i32_1 = arith.constant 0 : i32
    return %c0_i32, %c0_i32_0 : i32, i32
  }
  func.func @transform_7(%arg0: i32, %arg1: i32) -> (i32, i32) {
    %c0_i32 = arith.constant 0 : i32
    %c0_i32_0 = arith.constant 0 : i32
    %c0_i32_1 = arith.constant 0 : i32
    return %c0_i32, %c0_i32_0 : i32, i32
  }
  func.func @transform_8(%arg0: i32, %arg1: i32) -> (i32, i32) {
    %c0_i32 = arith.constant 0 : i32
    %c0_i32_0 = arith.constant 0 : i32
    %c0_i32_1 = arith.constant 0 : i32
    return %c0_i32, %c0_i32_0 : i32, i32
  }
  func.func @transform_9(%arg0: i32, %arg1: i32) -> (i32, i32) {
    %c0_i32 = arith.constant 0 : i32
    %c0_i32_0 = arith.constant 0 : i32
    %c0_i32_1 = arith.constant 0 : i32
    return %c0_i32, %c0_i32_0 : i32, i32
  }
  func.func @transform_10(%arg0: i32, %arg1: i32) -> (i32, i32, i32) {
    %c0_i32 = arith.constant 0 : i32
    %c0_i32_0 = arith.constant 0 : i32
    return %arg0, %c0_i32, %arg1 : i32, i32, i32
  }
}

</mosaic_0001>

<llo_original>
// kernel: resnet_block_conv1d.3
$region0: #{resnet_block_conv1d.3}
  #allocation0 [shape = 'u32[]', space=smem, size = 0x4, offset = 0x4, fixed_abs, tag = 'smem constant byte address 0x4 - core index']
  #allocation1 [shape = 'u32[144,128]{1,0:T(1,128)}', space=vmem, size = 0x12000, scoped, tag = 'internal scratch']
  %s0 = inlined_call_operand.hbm [shape: f32[2,16,128], index: 0, kind: input, shape index: {}]
  %s1 = inlined_call_operand.hbm [shape: f32[2,16,1], index: 1, kind: output, shape index: {0}]
  %s2 = inlined_call_operand.hbm [shape: f32[2,16,1], index: 2, kind: output, shape index: {1}]
  %3 = xla_tuple %s1, %s2
  %s4 = sld [smem:[#allocation0]]
  $region53: #{resnet_block_conv1d.3} parent=0
    _
  %s6 = ssub.s32 1, %s4
  %s7 = scalar_select 0, %s6, %s4
  $region1: #{resnet_block_conv1d.3} parent=0
    #allocation2 [shape = 'u8[16384]{0}', space=vmem, size = 0x4000, scoped, tag = 'input window, operand 0']
    #allocation3 [shape = 's32[2]{0}', space=sflag, size = 0x8, scoped, tag = 'scoped memory for resnet_block_conv1d.3']
    #allocation4 [shape = 's32[2]{0}', space=sflag, size = 0x8, scoped, tag = 'scoped memory for resnet_block_conv1d.3']
    #allocation5 [shape = 'u8[16384]{0}', space=vmem, size = 0x4000, scoped, tag = 'output window, operand 0']
    #allocation6 [shape = 'u8[16384]{0}', space=vmem, size = 0x4000, scoped, tag = 'output window, operand 1']
    #allocation7 [shape = 's32[2]{0}', space=sflag, size = 0x8, scoped, tag = 'scoped memory for resnet_block_conv1d.3']
    %8 = vsyncpa [#allocation3], 0
    %s9 = scalar_lea.sflag [#allocation3], 1
    %10 = vsyncpa %s9, 0
    %11 = vsyncpa [#allocation4], 0
    %s12 = scalar_lea.sflag [#allocation4], 1
    %13 = vsyncpa %s12, 0
    %14 = vsyncpa [#allocation7], 0
    %s15 = scalar_lea.sflag [#allocation7], 1
    %16 = vsyncpa %s15, 0
    loop: start=0, step=1, limit=4
    $region2: #{resnet_block_conv1d.3} parent=1 // loop_pre_header
      _
    $region3: #{resnet_block_conv1d.3} parent=1 // loop_header
      %s18 = sphi 0, %s22
      %p19 = scmp.ge.s32.totalorder %s18, 4
      %s25 = sphi 0, %s37
      %s26 = sphi 0, %s33
      %s27 = sphi 0, %s25
      %s28 = sphi 0, %s26
      %s29 = sphi 0, %s27
      %s30 = sphi 0, %s28
      %s42 = sphi 0, %s44
      %s45 = sphi 0, %s42
      %s46 = sphi 0, %s45
      %s62 = sphi 0, %s46
      %s68 = sphi 0, %s70
      %s71 = sphi 0, %s68
      %s72 = sphi 0, %s71
      %s88 = sphi 0, %s72
      %s94 = sphi 0, %s96
      %s97 = sphi 0, %s94
      %s98 = sphi 0, %s97
      %s114 = sphi 0, %s98
    $region4: #{resnet_block_conv1d.3} parent=1 // loop_header_branch
      %21 = sbr.rel (%p19) target = $region8
    $region5: #{resnet_block_conv1d.3} parent=1 // loop_body
      %s23 = ssub.s32 %s18, 1
      %s24 = ssub.s32 %s18, 2
      %s31 = sadd.s32 1, %s26
      %p32 = scmp.ge.s32.totalorder %s31, 1
      %s33 = scalar_select %p32, 0, %s31
      %s34 = sadd.s32 1, %s25
      %s35 = scalar_select %p32, %s34, %s25
      %p36 = scmp.ge.s32.totalorder %s35, 2
      %s37 = scalar_select %p36, 0, %s35
      %s38 = ssub.s32 %s25, %s37
      %s39 = ssub.s32 %s26, %s33
      %s40 = sor.u32 %s38, %s39
      %p41 = scmp.eq.s32.totalorder %s40, 0
      %s43 = sadd.s32 %s42, 1
      %s44 = scalar_select %p41, %s42, %s43
      %p47 = pneg %p41
      %p48 = scmp.eq.s32.totalorder %s18, 1
      %p49 = por %p47, %p48
      %p50 = scmp.ne.s32.totalorder %s42, %s45
      %p51 = scmp.eq.s32.totalorder %s18, 0
      %p52 = por %p50, %p51
      %p53 = scmp.ne.s32.totalorder %s42, %s45
      %p54 = scmp.eq.s32.totalorder %s23, 1
      %p55 = por %p53, %p54
      %p56 = scmp.ne.s32.totalorder %s45, %s46
      %p57 = scmp.eq.s32.totalorder %s23, 0
      %p58 = por %p56, %p57
      %p59 = scmp.ne.s32.totalorder %s45, %s46
      %p60 = scmp.eq.s32.totalorder %s24, 1
      %p61 = por %p59, %p60
      %p63 = scmp.ne.s32.totalorder %s46, %s62
      %p64 = scmp.eq.s32.totalorder %s24, 0
      %p65 = por %p63, %p64
      %s66 = ssub.s32 %s25, %s37
      %p67 = scmp.eq.s32.totalorder %s66, 0
      %s69 = sadd.s32 %s68, 1
      %s70 = scalar_select %p67, %s68, %s69
      %p73 = pneg %p67
      %p74 = scmp.eq.s32.totalorder %s18, 1
      %p75 = por %p73, %p74
      %p76 = scmp.ne.s32.totalorder %s68, %s71
      %p77 = scmp.eq.s32.totalorder %s18, 0
      %p78 = por %p76, %p77
      %p79 = scmp.ne.s32.totalorder %s68, %s71
      %p80 = scmp.eq.s32.totalorder %s23, 1
      %p81 = por %p79, %p80
      %p82 = scmp.ne.s32.totalorder %s71, %s72
      %p83 = scmp.eq.s32.totalorder %s23, 0
      %p84 = por %p82, %p83
      %p85 = scmp.ne.s32.totalorder %s71, %s72
      %p86 = scmp.eq.s32.totalorder %s24, 1
      %p87 = por %p85, %p86
      %p89 = scmp.ne.s32.totalorder %s72, %s88
      %p90 = scmp.eq.s32.totalorder %s24, 0
      %p91 = por %p89, %p90
      %s92 = ssub.s32 %s25, %s37
      %p93 = scmp.eq.s32.totalorder %s92, 0
      %s95 = sadd.s32 %s94, 1
      %s96 = scalar_select %p93, %s94, %s95
      %p99 = pneg %p93
      %p100 = scmp.eq.s32.totalorder %s18, 1
      %p101 = por %p99, %p100
      %p102 = scmp.ne.s32.totalorder %s94, %s97
      %p103 = scmp.eq.s32.totalorder %s18, 0
      %p104 = por %p102, %p103
      %p105 = scmp.ne.s32.totalorder %s94, %s97
      %p106 = scmp.eq.s32.totalorder %s23, 1
      %p107 = por %p105, %p106
      %p108 = scmp.ne.s32.totalorder %s97, %s98
      %p109 = scmp.eq.s32.totalorder %s23, 0
      %p110 = por %p108, %p109
      %p111 = scmp.ne.s32.totalorder %s97, %s98
      %p112 = scmp.eq.s32.totalorder %s24, 1
      %p113 = por %p111, %p112
      %p115 = scmp.ne.s32.totalorder %s98, %s114
      %p116 = scmp.eq.s32.totalorder %s24, 0
      %p117 = por %p115, %p116
      %p118 = scmp.le.s32.totalorder 1, %s18
      %p119 = scmp.lt.s32.totalorder %s18, 3
      %p120 = pnand %p118, %p119
      %p121 = pneg %p120
      // Predicated region
      $region9: #{resnet_block_conv1d.3} parent=5 // pred_check
        _
      $region10: #{resnet_block_conv1d.3} parent=5 // pred_check_branch
        %123 = sbr.rel (%p120) target = $region12
      $region11: #{resnet_block_conv1d.3} parent=5 // pred_region
        %s124 = ssub.s32 %s18, 1
      $region12: #{resnet_block_conv1d.3} parent=5 // pred_fallthru
        _
      %p125 = scmp.lt.s32.totalorder %s18, 2
      // Predicated region
      $region13: #{resnet_block_conv1d.3} parent=5 // pred_check
        %p126 = pneg %p125
      $region14: #{resnet_block_conv1d.3} parent=5 // pred_check_branch
        %128 = sbr.rel (%p126) target = $region16
      $region15: #{resnet_block_conv1d.3} parent=5 // pred_region
        // Predicated region
        $region17: #{resnet_block_conv1d.3} parent=15 // pred_check
          %p129 = pneg %p52
        $region18: #{resnet_block_conv1d.3} parent=15 // pred_check_branch
          %131 = sbr.rel (%p129) target = $region20
        $region19: #{resnet_block_conv1d.3} parent=15 // pred_region
          %s132 = sand.u32 %s42, 1
          %s133 = scalar_lea.sflag [#allocation3], %s132
          %s134 = sand.u32 %s42, 1
          %s135 = smul.addr %s134, 16
          %s136 = scalar_lea.vmem [#allocation2], %s135
          %s138 = ssub.s32 256, 256
          %139 = vsyncadd %s133, %s138
          %s140 = smul.addr %s25, 2
          %s141 = sadd.s32 %s26, %s140
          %s142 = smul.addr %s141, 128
          %s143 = scalar_lea.hbm %s0, %s142
          %s144 = sshll.u32 %s136, 4
          %s145 = int_to_ptr.vmem [resolvable:$true] %s144
          %150 = dma.hbm_to_vmem [thread:$0]  %s143, 256, %s145, %s133, 128, 128, 8
        $region20: #{resnet_block_conv1d.3} parent=15 // pred_fallthru
          _
      $region16: #{resnet_block_conv1d.3} parent=5 // pred_fallthru
        _
      %p151 = scmp.le.s32.totalorder 1, %s18
      %p152 = scmp.lt.s32.totalorder %s18, 3
      %p153 = pnand %p151, %p152
      %p154 = pneg %p153
      // Predicated region
      $region21: #{resnet_block_conv1d.3} parent=5 // pred_check
        _
      $region22: #{resnet_block_conv1d.3} parent=5 // pred_check_branch
        %156 = sbr.rel (%p153) target = $region24
      $region23: #{resnet_block_conv1d.3} parent=5 // pred_region
        %s157 = ssub.s32 %s18, 1
        %s158 = sand.u32 %s45, 1
        %s159 = scalar_lea.sflag [#allocation3], %s158
        %s160 = sand.u32 %s45, 1
        %s161 = smul.addr %s160, 16
        %s162 = scalar_lea.vmem [#allocation2], %s161
        // Predicated region
        $region25: #{resnet_block_conv1d.3} parent=23 // pred_check
          %p163 = pneg %p58
        $region26: #{resnet_block_conv1d.3} parent=23 // pred_check_branch
          %165 = sbr.rel (%p163) target = $region28
        $region27: #{resnet_block_conv1d.3} parent=23 // pred_region
          %166 = dma.done %s159, 256
        $region28: #{resnet_block_conv1d.3} parent=23 // pred_fallthru
          _
        %s167 = sand.u32 %s45, 1
        %s168 = scalar_lea.sflag [#allocation3], %s167
        %s169 = sand.u32 %s45, 1
        %s170 = smul.addr %s169, 16
        %s171 = scalar_lea.vmem [#allocation2], %s170
        %p172 = pneg %p58
        %p173 = pneg %p55
        %p174 = pneg %p84
        %p175 = pneg %p81
        %s176 = sand.u32 %s71, 1
        %s177 = scalar_lea.sflag [#allocation4], %s176
        %s178 = sand.u32 %s71, 1
        %s179 = smul.addr %s178, 16
        %s180 = scalar_lea.vmem [#allocation5], %s179
        %p181 = pneg %p110
        %p182 = pneg %p107
        %s183 = sand.u32 %s97, 1
        %s184 = scalar_lea.sflag [#allocation7], %s183
        %s185 = sand.u32 %s97, 1
        %s186 = smul.addr %s185, 16
        %s187 = scalar_lea.vmem [#allocation6], %s186
        %p188 = scmp.eq.s32.totalorder %s28, 0
        // Predicated region
        $region29: #{resnet_block_conv1d.3} parent=23 // pred_check
          %p189 = pneg %p188
        $region30: #{resnet_block_conv1d.3} parent=23 // pred_check_branch
          %191 = sbr.rel (%p189) target = $region32
        $region31: #{resnet_block_conv1d.3} parent=23 // pred_region
          %vm192 = vcmask 7168
          %193 = vst.msk [vmem:[%s180] sm:$0xff] %vm192, 0.0
          %194 = vst.msk [vmem:[%s180 + $0x8] sm:$0xff] %vm192, 0.0
          %195 = vst.msk [vmem:[%s187] sm:$0xff] %vm192, 0.0
          %196 = vst.msk [vmem:[%s187 + $0x8] sm:$0xff] %vm192, 0.0
        $region32: #{resnet_block_conv1d.3} parent=23 // pred_fallthru
          _
        %v197 = vld [vmem:[%s162] sm:$0xff]
        %v198 = vld [vmem:[%s162 + $0x8] sm:$0xff]
        %v199 = vld [vmem:[%s180] sm:$0xff]
        %v200 = vld [vmem:[%s180 + $0x8] sm:$0xff]
        %201 = vadd.xlane.f32.xlu0 %v197
        %v202 = vpop.xlane.xlu0 %201
        %203 = vadd.xlane.f32.xlu0 %v198
        %v204 = vpop.xlane.xlu0 %203
        %v205 = vadd.f32 %v199, %v202
        %v206 = vadd.f32 %v200, %v204
        %vm207 = vcmask 7168
        %208 = vst.msk [vmem:[%s180] sm:$0xff] %vm207, %v205
        %209 = vst.msk [vmem:[%s180 + $0x8] sm:$0xff] %vm207, %v206
        %v210 = vld [vmem:[%s187] sm:$0xff]
        %v211 = vld [vmem:[%s187 + $0x8] sm:$0xff]
        %v212 = vmul.f32 %v197, %v197
        %v213 = vmul.f32 %v198, %v198
        %214 = vadd.xlane.f32.xlu0 %v212
        %v215 = vpop.xlane.xlu0 %214
        %216 = vadd.xlane.f32.xlu0 %v213
        %v217 = vpop.xlane.xlu0 %216
        %v218 = vadd.f32 %v210, %v215
        %v219 = vadd.f32 %v211, %v217
        %220 = vst.msk [vmem:[%s187] sm:$0xff] %vm207, %v218
        %221 = vst.msk [vmem:[%s187 + $0x8] sm:$0xff] %vm207, %v219
        %s222 = sand.u32 %s71, 1
        %s223 = scalar_lea.sflag [#allocation4], %s222
        %s224 = sand.u32 %s71, 1
        %s225 = smul.addr %s224, 16
        %s226 = scalar_lea.vmem [#allocation5], %s225
        %s227 = sand.u32 %s97, 1
        %s228 = scalar_lea.sflag [#allocation7], %s227
        %s229 = sand.u32 %s97, 1
        %s230 = smul.addr %s229, 16
        %s231 = scalar_lea.vmem [#allocation6], %s230
        // Predicated region
        $region33: #{resnet_block_conv1d.3} parent=23 // pred_check
          %p232 = pneg %p81
        $region34: #{resnet_block_conv1d.3} parent=23 // pred_check_branch
          %234 = sbr.rel (%p232) target = $region36
        $region35: #{resnet_block_conv1d.3} parent=23 // pred_region
          %s236 = ssub.s32 256, 256
          %237 = vsyncadd %s223, %s236
          %s238 = smul.addr %s27, 2
          %s239 = smul.addr %s238, 128
          %s240 = scalar_lea.hbm %s1, %s239
          %s241 = sshll.u32 %s226, 4
          %s242 = int_to_ptr.vmem [resolvable:$true] %s241
          %247 = dma.vmem_to_hbm [thread:$0]  %s242, 256, %s240, %s223, 128, 128, 8
        $region36: #{resnet_block_conv1d.3} parent=23 // pred_fallthru
          _
        // Predicated region
        $region37: #{resnet_block_conv1d.3} parent=23 // pred_check
          %p248 = pneg %p107
        $region38: #{resnet_block_conv1d.3} parent=23 // pred_check_branch
          %250 = sbr.rel (%p248) target = $region40
        $region39: #{resnet_block_conv1d.3} parent=23 // pred_region
          %s252 = ssub.s32 256, 256
          %253 = vsyncadd %s228, %s252
          %s254 = smul.addr %s27, 2
          %s255 = smul.addr %s254, 128
          %s256 = scalar_lea.hbm %s2, %s255
          %s257 = sshll.u32 %s231, 4
          %s258 = int_to_ptr.vmem [resolvable:$true] %s257
          %263 = dma.vmem_to_hbm [thread:$0]  %s258, 256, %s256, %s228, 128, 128, 8
        $region40: #{resnet_block_conv1d.3} parent=23 // pred_fallthru
          _
      $region24: #{resnet_block_conv1d.3} parent=5 // pred_fallthru
        _
      %p264 = scmp.le.s32.totalorder 2, %s18
      // Predicated region
      $region41: #{resnet_block_conv1d.3} parent=5 // pred_check
        %p265 = pneg %p264
      $region42: #{resnet_block_conv1d.3} parent=5 // pred_check_branch
        %267 = sbr.rel (%p265) target = $region44
      $region43: #{resnet_block_conv1d.3} parent=5 // pred_region
        %s268 = ssub.s32 %s18, 2
        // Predicated region
        $region45: #{resnet_block_conv1d.3} parent=43 // pred_check
          %p269 = pneg %p87
        $region46: #{resnet_block_conv1d.3} parent=43 // pred_check_branch
          %271 = sbr.rel (%p269) target = $region48
        $region47: #{resnet_block_conv1d.3} parent=43 // pred_region
          %s272 = sand.u32 %s72, 1
          %s273 = scalar_lea.sflag [#allocation4], %s272
          %s274 = sand.u32 %s72, 1
          %s275 = smul.addr %s274, 16
          %s276 = scalar_lea.vmem [#allocation5], %s275
          %277 = dma.done %s273, 256
        $region48: #{resnet_block_conv1d.3} parent=43 // pred_fallthru
          _
        // Predicated region
        $region49: #{resnet_block_conv1d.3} parent=43 // pred_check
          %p278 = pneg %p113
        $region50: #{resnet_block_conv1d.3} parent=43 // pred_check_branch
          %280 = sbr.rel (%p278) target = $region52
        $region51: #{resnet_block_conv1d.3} parent=43 // pred_region
          %s281 = sand.u32 %s98, 1
          %s282 = scalar_lea.sflag [#allocation7], %s281
          %s283 = sand.u32 %s98, 1
          %s284 = smul.addr %s283, 16
          %s285 = scalar_lea.vmem [#allocation6], %s284
          %286 = dma.done %s282, 256
        $region52: #{resnet_block_conv1d.3} parent=43 // pred_fallthru
          _
      $region44: #{resnet_block_conv1d.3} parent=5 // pred_fallthru
        _
    $region6: #{resnet_block_conv1d.3} parent=1 // loop_footer
      %s22 = sadd.s32 1, %s18
    $region7: #{resnet_block_conv1d.3} parent=1 // loop_footer_branch
      %17 = sbr.rel target = $region3
    $region8: #{resnet_block_conv1d.3} parent=1 // loop_exit
      _
    %287 = vsyncpa [#allocation3], 1
    %s288 = scalar_lea.sflag [#allocation3], 1
    %289 = vsyncpa %s288, 1
    %290 = vsyncpa [#allocation4], 1
    %s291 = scalar_lea.sflag [#allocation4], 1
    %292 = vsyncpa %s291, 1
    %293 = vsyncpa [#allocation7], 1
    %s294 = scalar_lea.sflag [#allocation7], 1
    %295 = vsyncpa %s294, 1

// kernel: resnet_block_conv1d.4
$region0: #{resnet_block_conv1d.4}
  #allocation0 [shape = 'u32[]', space=smem, size = 0x4, offset = 0x4, fixed_abs, tag = 'smem constant byte address 0x4 - core index']
  #allocation1 [shape = 'u32[144,128]{1,0:T(1,128)}', space=vmem, size = 0x12000, scoped, tag = 'internal scratch']
  %s0 = inlined_call_operand.hbm [shape: f32[2,16,128], index: 0, kind: input, shape index: {}]
  %s1 = inlined_call_operand.hbm [shape: f32[16,1], index: 1, kind: input, shape index: {}]
  %s2 = inlined_call_operand.hbm [shape: f32[16,1], index: 2, kind: input, shape index: {}]
  %s3 = inlined_call_operand.hbm [shape: bf16[32,16], index: 3, kind: input, shape index: {}]
  %s4 = inlined_call_operand.hbm [shape: f32[2,32,1], index: 4, kind: output, shape index: {0}]
  %s5 = inlined_call_operand.hbm [shape: f32[2,32,1], index: 5, kind: output, shape index: {1}]
  %6 = xla_tuple %s4, %s5
  %s7 = sld [smem:[#allocation0]]
  $region77: #{resnet_block_conv1d.4} parent=0
    _
  %s9 = ssub.s32 1, %s7
  %s10 = scalar_select 0, %s9, %s7
  $region1: #{resnet_block_conv1d.4} parent=0
    #allocation2 [shape = 'u8[16384]{0}', space=vmem, size = 0x4000, scoped, tag = 'input window, operand 0']
    #allocation3 [shape = 's32[2]{0}', space=sflag, size = 0x8, scoped, tag = 'scoped memory for resnet_block_conv1d.4']
    #allocation4 [shape = 's32[2]{0}', space=sflag, size = 0x8, scoped, tag = 'scoped memory for resnet_block_conv1d.4']
    #allocation5 [shape = 'u8[8192]{0}', space=vmem, size = 0x2000, scoped, tag = 'input window, operand 1, single buffered']
    #allocation6 [shape = 's32[1]{0}', space=sflag, size = 0x4, scoped, tag = 'scoped memory for resnet_block_conv1d.4']
    #allocation7 [shape = 'u8[8192]{0}', space=vmem, size = 0x2000, scoped, tag = 'input window, operand 2, single buffered']
    #allocation8 [shape = 'u8[8192]{0}', space=vmem, size = 0x2000, scoped, tag = 'input window, operand 3, single buffered']
    #allocation9 [shape = 's32[1]{0}', space=sflag, size = 0x4, scoped, tag = 'scoped memory for resnet_block_conv1d.4']
    #allocation10 [shape = 'u8[32768]{0}', space=vmem, size = 0x8000, scoped, tag = 'output window, operand 0']
    #allocation11 [shape = 'u8[32768]{0}', space=vmem, size = 0x8000, scoped, tag = 'output window, operand 1']
    #allocation12 [shape = 's32[2]{0}', space=sflag, size = 0x8, scoped, tag = 'scoped memory for resnet_block_conv1d.4']
    %11 = vsyncpa [#allocation3], 0
    %s12 = scalar_lea.sflag [#allocation3], 1
    %13 = vsyncpa %s12, 0
    %14 = vsyncpa [#allocation6], 0
    %15 = vsyncpa [#allocation9], 0
    %16 = vsyncpa [#allocation4], 0
    %s17 = scalar_lea.sflag [#allocation4], 1
    %18 = vsyncpa %s17, 0
    %19 = vsyncpa [#allocation12], 0
    %s20 = scalar_lea.sflag [#allocation12], 1
    %21 = vsyncpa %s20, 0
    loop: start=0, step=1, limit=4
    $region2: #{resnet_block_conv1d.4} parent=1 // loop_pre_header
      _
    $region3: #{resnet_block_conv1d.4} parent=1 // loop_header
      %s23 = sphi 0, %s27
      %p24 = scmp.ge.s32.totalorder %s23, 4
      %s30 = sphi 0, %s42
      %s31 = sphi 0, %s38
      %s32 = sphi 0, %s30
      %s33 = sphi 0, %s31
      %s34 = sphi 0, %s32
      %s35 = sphi 0, %s33
      %s47 = sphi 0, %s49
      %s50 = sphi 0, %s47
      %s51 = sphi 0, %s50
      %s67 = sphi 0, %s51
      %s71 = sphi 0, %s71
      %s73 = sphi 0, %s71
      %s74 = sphi 0, %s73
      %s88 = sphi 0, %s74
      %s92 = sphi 0, %s92
      %s94 = sphi 0, %s92
      %s95 = sphi 0, %s94
      %s109 = sphi 0, %s95
      %s113 = sphi 0, %s113
      %s115 = sphi 0, %s113
      %s116 = sphi 0, %s115
      %s130 = sphi 0, %s116
      %s136 = sphi 0, %s138
      %s139 = sphi 0, %s136
      %s140 = sphi 0, %s139
      %s156 = sphi 0, %s140
      %s162 = sphi 0, %s164
      %s165 = sphi 0, %s162
      %s166 = sphi 0, %s165
      %s182 = sphi 0, %s166
    $region4: #{resnet_block_conv1d.4} parent=1 // loop_header_branch
      %26 = sbr.rel (%p24) target = $region8
    $region5: #{resnet_block_conv1d.4} parent=1 // loop_body
      %s28 = ssub.s32 %s23, 1
      %s29 = ssub.s32 %s23, 2
      %s36 = sadd.s32 1, %s31
      %p37 = scmp.ge.s32.totalorder %s36, 1
      %s38 = scalar_select %p37, 0, %s36
      %s39 = sadd.s32 1, %s30
      %s40 = scalar_select %p37, %s39, %s30
      %p41 = scmp.ge.s32.totalorder %s40, 2
      %s42 = scalar_select %p41, 0, %s40
      %s43 = ssub.s32 %s30, %s42
      %s44 = ssub.s32 %s31, %s38
      %s45 = sor.u32 %s43, %s44
      %p46 = scmp.eq.s32.totalorder %s45, 0
      %s48 = sadd.s32 %s47, 1
      %s49 = scalar_select %p46, %s47, %s48
      %p52 = pneg %p46
      %p53 = scmp.eq.s32.totalorder %s23, 1
      %p54 = por %p52, %p53
      %p55 = scmp.ne.s32.totalorder %s47, %s50
      %p56 = scmp.eq.s32.totalorder %s23, 0
      %p57 = por %p55, %p56
      %p58 = scmp.ne.s32.totalorder %s47, %s50
      %p59 = scmp.eq.s32.totalorder %s28, 1
      %p60 = por %p58, %p59
      %p61 = scmp.ne.s32.totalorder %s50, %s51
      %p62 = scmp.eq.s32.totalorder %s28, 0
      %p63 = por %p61, %p62
      %p64 = scmp.ne.s32.totalorder %s50, %s51
      %p65 = scmp.eq.s32.totalorder %s29, 1
      %p66 = por %p64, %p65
      %p68 = scmp.ne.s32.totalorder %s51, %s67
      %p69 = scmp.eq.s32.totalorder %s29, 0
      %p70 = por %p68, %p69
      %s72 = sadd.s32 %s71, 1
      %p75 = scmp.eq.s32.totalorder %s23, 1
      %p76 = scmp.ne.s32.totalorder %s71, %s73
      %p77 = scmp.eq.s32.totalorder %s23, 0
      %p78 = por %p76, %p77
      %p79 = scmp.ne.s32.totalorder %s71, %s73
      %p80 = scmp.eq.s32.totalorder %s28, 1
      %p81 = por %p79, %p80
      %p82 = scmp.ne.s32.totalorder %s73, %s74
      %p83 = scmp.eq.s32.totalorder %s28, 0
      %p84 = por %p82, %p83
      %p85 = scmp.ne.s32.totalorder %s73, %s74
      %p86 = scmp.eq.s32.totalorder %s29, 1
      %p87 = por %p85, %p86
      %p89 = scmp.ne.s32.totalorder %s74, %s88
      %p90 = scmp.eq.s32.totalorder %s29, 0
      %p91 = por %p89, %p90
      %s93 = sadd.s32 %s92, 1
      %p96 = scmp.eq.s32.totalorder %s23, 1
      %p97 = scmp.ne.s32.totalorder %s92, %s94
      %p98 = scmp.eq.s32.totalorder %s23, 0
      %p99 = por %p97, %p98
      %p100 = scmp.ne.s32.totalorder %s92, %s94
      %p101 = scmp.eq.s32.totalorder %s28, 1
      %p102 = por %p100, %p101
      %p103 = scmp.ne.s32.totalorder %s94, %s95
      %p104 = scmp.eq.s32.totalorder %s28, 0
      %p105 = por %p103, %p104
      %p106 = scmp.ne.s32.totalorder %s94, %s95
      %p107 = scmp.eq.s32.totalorder %s29, 1
      %p108 = por %p106, %p107
      %p110 = scmp.ne.s32.totalorder %s95, %s109
      %p111 = scmp.eq.s32.totalorder %s29, 0
      %p112 = por %p110, %p111
      %s114 = sadd.s32 %s113, 1
      %p117 = scmp.eq.s32.totalorder %s23, 1
      %p118 = scmp.ne.s32.totalorder %s113, %s115
      %p119 = scmp.eq.s32.totalorder %s23, 0
      %p120 = por %p118, %p119
      %p121 = scmp.ne.s32.totalorder %s113, %s115
      %p122 = scmp.eq.s32.totalorder %s28, 1
      %p123 = por %p121, %p122
      %p124 = scmp.ne.s32.totalorder %s115, %s116
      %p125 = scmp.eq.s32.totalorder %s28, 0
      %p126 = por %p124, %p125
      %p127 = scmp.ne.s32.totalorder %s115, %s116
      %p128 = scmp.eq.s32.totalorder %s29, 1
      %p129 = por %p127, %p128
      %p131 = scmp.ne.s32.totalorder %s116, %s130
      %p132 = scmp.eq.s32.totalorder %s29, 0
      %p133 = por %p131, %p132
      %s134 = ssub.s32 %s30, %s42
      %p135 = scmp.eq.s32.totalorder %s134, 0
      %s137 = sadd.s32 %s136, 1
      %s138 = scalar_select %p135, %s136, %s137
      %p141 = pneg %p135
      %p142 = scmp.eq.s32.totalorder %s23, 1
      %p143 = por %p141, %p142
      %p144 = scmp.ne.s32.totalorder %s136, %s139
      %p145 = scmp.eq.s32.totalorder %s23, 0
      %p146 = por %p144, %p145
      %p147 = scmp.ne.s32.totalorder %s136, %s139
      %p148 = scmp.eq.s32.totalorder %s28, 1
      %p149 = por %p147, %p148
      %p150 = scmp.ne.s32.totalorder %s139, %s140
      %p151 = scmp.eq.s32.totalorder %s28, 0
      %p152 = por %p150, %p151
      %p153 = scmp.ne.s32.totalorder %s139, %s140
      %p154 = scmp.eq.s32.totalorder %s29, 1
      %p155 = por %p153, %p154
      %p157 = scmp.ne.s32.totalorder %s140, %s156
      %p158 = scmp.eq.s32.totalorder %s29, 0
      %p159 = por %p157, %p158
      %s160 = ssub.s32 %s30, %s42
      %p161 = scmp.eq.s32.totalorder %s160, 0
      %s163 = sadd.s32 %s162, 1
      %s164 = scalar_select %p161, %s162, %s163
      %p167 = pneg %p161
      %p168 = scmp.eq.s32.totalorder %s23, 1
      %p169 = por %p167, %p168
      %p170 = scmp.ne.s32.totalorder %s162, %s165
      %p171 = scmp.eq.s32.totalorder %s23, 0
      %p172 = por %p170, %p171
      %p173 = scmp.ne.s32.totalorder %s162, %s165
      %p174 = scmp.eq.s32.totalorder %s28, 1
      %p175 = por %p173, %p174
      %p176 = scmp.ne.s32.totalorder %s165, %s166
      %p177 = scmp.eq.s32.totalorder %s28, 0
      %p178 = por %p176, %p177
      %p179 = scmp.ne.s32.totalorder %s165, %s166
      %p180 = scmp.eq.s32.totalorder %s29, 1
      %p181 = por %p179, %p180
      %p183 = scmp.ne.s32.totalorder %s166, %s182
      %p184 = scmp.eq.s32.totalorder %s29, 0
      %p185 = por %p183, %p184
      %p186 = scmp.le.s32.totalorder 1, %s23
      %p187 = scmp.lt.s32.totalorder %s23, 3
      %p188 = pnand %p186, %p187
      %p189 = pneg %p188
      // Predicated region
      $region9: #{resnet_block_conv1d.4} parent=5 // pred_check
        _
      $region10: #{resnet_block_conv1d.4} parent=5 // pred_check_branch
        %191 = sbr.rel (%p188) target = $region12
      $region11: #{resnet_block_conv1d.4} parent=5 // pred_region
        %s192 = ssub.s32 %s23, 1
        // Predicated region
        $region13: #{resnet_block_conv1d.4} parent=11 // pred_check
          %p193 = pneg %p84
        $region14: #{resnet_block_conv1d.4} parent=11 // pred_check_branch
          %195 = sbr.rel (%p193) target = $region16
        $region15: #{resnet_block_conv1d.4} parent=11 // pred_region
          %s197 = ssub.s32 256, 256
          %198 = vsyncadd [#allocation6], %s197
          %s199 = sshll.u32 [#allocation5], 4
          %s200 = int_to_ptr.vmem [resolvable:$true] %s199
          %205 = dma.hbm_to_vmem [thread:$0]  %s1, 256, %s200, [#allocation6], 128, 128, 8
        $region16: #{resnet_block_conv1d.4} parent=11 // pred_fallthru
          _
        // Predicated region
        $region17: #{resnet_block_conv1d.4} parent=11 // pred_check
          %p206 = pneg %p105
        $region18: #{resnet_block_conv1d.4} parent=11 // pred_check_branch
          %208 = sbr.rel (%p206) target = $region20
        $region19: #{resnet_block_conv1d.4} parent=11 // pred_region
          %s210 = ssub.s32 256, 256
          %211 = vsyncadd [#allocation6], %s210
          %s212 = sshll.u32 [#allocation7], 4
          %s213 = int_to_ptr.vmem [resolvable:$true] %s212
          %218 = dma.hbm_to_vmem [thread:$0]  %s2, 256, %s213, [#allocation6], 128, 128, 8
        $region20: #{resnet_block_conv1d.4} parent=11 // pred_fallthru
          _
        // Predicated region
        $region21: #{resnet_block_conv1d.4} parent=11 // pred_check
          %p219 = pneg %p126
        $region22: #{resnet_block_conv1d.4} parent=11 // pred_check_branch
          %221 = sbr.rel (%p219) target = $region24
        $region23: #{resnet_block_conv1d.4} parent=11 // pred_region
          %s223 = ssub.s32 256, 256
          %224 = vsyncadd [#allocation9], %s223
          %s225 = sshll.u32 [#allocation8], 4
          %s226 = int_to_ptr.vmem [resolvable:$true] %s225
          %231 = dma.hbm_to_vmem [thread:$0]  %s3, 256, %s226, [#allocation9], 64, 64, 4
        $region24: #{resnet_block_conv1d.4} parent=11 // pred_fallthru
          _
      $region12: #{resnet_block_conv1d.4} parent=5 // pred_fallthru
        _
      %p232 = scmp.lt.s32.totalorder %s23, 2
      // Predicated region
      $region25: #{resnet_block_conv1d.4} parent=5 // pred_check
        %p233 = pneg %p232
      $region26: #{resnet_block_conv1d.4} parent=5 // pred_check_branch
        %235 = sbr.rel (%p233) target = $region28
      $region27: #{resnet_block_conv1d.4} parent=5 // pred_region
        // Predicated region
        $region29: #{resnet_block_conv1d.4} parent=27 // pred_check
          %p236 = pneg %p57
        $region30: #{resnet_block_conv1d.4} parent=27 // pred_check_branch
          %238 = sbr.rel (%p236) target = $region32
        $region31: #{resnet_block_conv1d.4} parent=27 // pred_region
          %s239 = sand.u32 %s47, 1
          %s240 = scalar_lea.sflag [#allocation3], %s239
          %s241 = sand.u32 %s47, 1
          %s242 = smul.addr %s241, 16
          %s243 = scalar_lea.vmem [#allocation2], %s242
          %s245 = ssub.s32 256, 256
          %246 = vsyncadd %s240, %s245
          %s247 = smul.addr %s30, 2
          %s248 = sadd.s32 %s31, %s247
          %s249 = smul.addr %s248, 128
          %s250 = scalar_lea.hbm %s0, %s249
          %s251 = sshll.u32 %s243, 4
          %s252 = int_to_ptr.vmem [resolvable:$true] %s251
          %257 = dma.hbm_to_vmem [thread:$0]  %s250, 256, %s252, %s240, 128, 128, 8
        $region32: #{resnet_block_conv1d.4} parent=27 // pred_fallthru
          _
      $region28: #{resnet_block_conv1d.4} parent=5 // pred_fallthru
        _
      %p258 = scmp.le.s32.totalorder 1, %s23
      %p259 = scmp.lt.s32.totalorder %s23, 3
      %p260 = pnand %p258, %p259
      %p261 = pneg %p260
      // Predicated region
      $region33: #{resnet_block_conv1d.4} parent=5 // pred_check
        _
      $region34: #{resnet_block_conv1d.4} parent=5 // pred_check_branch
        %263 = sbr.rel (%p260) target = $region36
      $region35: #{resnet_block_conv1d.4} parent=5 // pred_region
        %s264 = ssub.s32 %s23, 1
        %s265 = sand.u32 %s50, 1
        %s266 = scalar_lea.sflag [#allocation3], %s265
        %s267 = sand.u32 %s50, 1
        %s268 = smul.addr %s267, 16
        %s269 = scalar_lea.vmem [#allocation2], %s268
        // Predicated region
        $region37: #{resnet_block_conv1d.4} parent=35 // pred_check
          %p270 = pneg %p63
        $region38: #{resnet_block_conv1d.4} parent=35 // pred_check_branch
          %272 = sbr.rel (%p270) target = $region40
        $region39: #{resnet_block_conv1d.4} parent=35 // pred_region
          %273 = dma.done %s266, 256
        $region40: #{resnet_block_conv1d.4} parent=35 // pred_fallthru
          _
        // Predicated region
        $region41: #{resnet_block_conv1d.4} parent=35 // pred_check
          %p274 = pneg %p84
        $region42: #{resnet_block_conv1d.4} parent=35 // pred_check_branch
          %276 = sbr.rel (%p274) target = $region44
        $region43: #{resnet_block_conv1d.4} parent=35 // pred_region
          %277 = dma.done [#allocation6], 256
        $region44: #{resnet_block_conv1d.4} parent=35 // pred_fallthru
          _
        // Predicated region
        $region45: #{resnet_block_conv1d.4} parent=35 // pred_check
          %p278 = pneg %p105
        $region46: #{resnet_block_conv1d.4} parent=35 // pred_check_branch
          %280 = sbr.rel (%p278) target = $region48
        $region47: #{resnet_block_conv1d.4} parent=35 // pred_region
          %281 = dma.done [#allocation6], 256
        $region48: #{resnet_block_conv1d.4} parent=35 // pred_fallthru
          _
        // Predicated region
        $region49: #{resnet_block_conv1d.4} parent=35 // pred_check
          %p282 = pneg %p126
        $region50: #{resnet_block_conv1d.4} parent=35 // pred_check_branch
          %284 = sbr.rel (%p282) target = $region52
        $region51: #{resnet_block_conv1d.4} parent=35 // pred_region
          %285 = dma.done [#allocation9], 256
        $region52: #{resnet_block_conv1d.4} parent=35 // pred_fallthru
          _
        %s286 = sand.u32 %s50, 1
        %s287 = scalar_lea.sflag [#allocation3], %s286
        %s288 = sand.u32 %s50, 1
        %s289 = smul.addr %s288, 16
        %s290 = scalar_lea.vmem [#allocation2], %s289
        %p291 = pneg %p63
        %p292 = pneg %p60
        %p293 = pneg %p84
        %p294 = pneg %p81
        %p295 = pneg %p105
        %p296 = pneg %p102
        %p297 = pneg %p126
        %p298 = pneg %p123
        %p299 = pneg %p152
        %p300 = pneg %p149
        %s301 = sand.u32 %s139, 1
        %s302 = scalar_lea.sflag [#allocation4], %s301
        %s303 = sand.u32 %s139, 1
        %s304 = smul.addr %s303, 32
        %s305 = scalar_lea.vmem [#allocation10], %s304
        %p306 = pneg %p178
        %p307 = pneg %p175
        %s308 = sand.u32 %s165, 1
        %s309 = scalar_lea.sflag [#allocation12], %s308
        %s310 = sand.u32 %s165, 1
        %s311 = smul.addr %s310, 32
        %s312 = scalar_lea.vmem [#allocation11], %s311
        %p314 = scmp.eq.s32.totalorder %s33, 0
        // Predicated region
        $region53: #{resnet_block_conv1d.4} parent=35 // pred_check
          %p315 = pneg %p314
        $region54: #{resnet_block_conv1d.4} parent=35 // pred_check_branch
          %317 = sbr.rel (%p315) target = $region56
        $region55: #{resnet_block_conv1d.4} parent=35 // pred_region
          %vm318 = vcmask 7168
          %319 = vst.msk [vmem:[%s305] sm:$0xff] %vm318, 0.0
          %320 = vst.msk [vmem:[%s305 + $0x8] sm:$0xff] %vm318, 0.0
          %321 = vst.msk [vmem:[%s305 + $0x10] sm:$0xff] %vm318, 0.0
          %322 = vst.msk [vmem:[%s305 + $0x18] sm:$0xff] %vm318, 0.0
          %323 = vst.msk [vmem:[%s312] sm:$0xff] %vm318, 0.0
          %324 = vst.msk [vmem:[%s312 + $0x8] sm:$0xff] %vm318, 0.0
          %325 = vst.msk [vmem:[%s312 + $0x10] sm:$0xff] %vm318, 0.0
          %326 = vst.msk [vmem:[%s312 + $0x18] sm:$0xff] %vm318, 0.0
        $region56: #{resnet_block_conv1d.4} parent=35 // pred_fallthru
          _
        %v327 = vld [vmem:[%s269] sm:$0xff]
        %v328 = vld [vmem:[%s269 + $0x8] sm:$0xff]
        %v329 = vld [vmem:[#allocation5] sm:$0xff]
        %v330 = vld [vmem:[#allocation5 + $0x8] sm:$0xff]
        %332 = vset.pattern.permute.xlu0 0
        %333 = vperm.xlu0 %332, %v329
        %v334 = vpop.permute.xlu0 %333
        %337 = vset.pattern.permute.xlu0 0
        %338 = vperm.xlu0 %337, %v330
        %v339 = vpop.permute.xlu0 %338
        %v341 = vmul.f32 %v334, %v327
        %v342 = vmul.f32 %v339, %v328
        %v343 = vld [vmem:[#allocation7] sm:$0xff]
        %v344 = vld [vmem:[#allocation7 + $0x8] sm:$0xff]
        %346 = vset.pattern.permute.xlu0 0
        %347 = vperm.xlu0 %346, %v343
        %v348 = vpop.permute.xlu0 %347
        %351 = vset.pattern.permute.xlu0 0
        %352 = vperm.xlu0 %351, %v344
        %v353 = vpop.permute.xlu0 %352
        %v355 = vadd.f32 %v341, %v348
        %v356 = vadd.f32 %v342, %v353
        %v357 = vmax.f32 %v355, 0.0
        %v358 = vmax.f32 %v356, 0.0
        %s359 = smul.u32 %s33, 128
        %v360 = vlaneseq
        %v361 = vand.u32 %v360, 127
        %v362 = vstv %s359
        %v363 = vadd.s32 %v362, %v361
        %vm364 = vcmp.lt.s32.totalorder %v363, 16
        %v365 = vsel %vm364, 1, 0
        %vm366 = vcmp.eq.s32.totalorder %v365, 1
        %v367 = vsel %vm366, %v357, 0.0
        %v368 = vsel %vm366, %v358, 0.0
        %v369 = vld [vmem:[#allocation8] sm:$0xf]
        %v370 = vld [vmem:[#allocation8 + $0x4] sm:$0xf]
        %v371 = vld [vmem:[#allocation8 + $0x8] sm:$0xf]
        %v372 = vld [vmem:[#allocation8 + $0xc] sm:$0xf]
        %v373 = vpack.c.bf16 %v368, %v367
        %v378 = vunpack.c.l.b16 %v369
        %v379 = vunpack.c.l.b16 %v370
        %v380 = vunpack.c.l.b16 %v371
        %v381 = vunpack.c.l.b16 %v372
        %v382 = vpack.c.b16 %v379, %v378
        %v383 = vpack.c.b16 %v381, %v380
        %vm384 = vcmask 130048
        %v386 = vsel %vm384, %v382, 0
        %v389 = vsel %vm384, %v383, 0
        %391 = vmatprep.subr.bf16.mxu0 0
        %392 = vmatpush1.bf16.msra.mxu0 %v373
        %393 = vmatprep.subr.bf16.mxu0 0
        %394 = vmatpush1.bf16.msra.mxu0 0
        %395 = vmatprep.subr.bf16.mxu0 0
        %396 = vmatpush1.bf16.msra.mxu0 0
        %397 = vmatprep.subr.bf16.mxu0 0
        %398 = vmatpush1.bf16.msra.mxu0 0
        %399 = vmatprep.subr.bf16.mxu0 0
        %400 = vmatpush1.bf16.msra.mxu0 0
        %401 = vmatprep.subr.bf16.mxu0 0
        %402 = vmatpush1.bf16.msra.mxu0 0
        %403 = vmatprep.subr.bf16.mxu0 0
        %404 = vmatpush1.bf16.msra.mxu0 0
        %405 = vmatprep.subr.bf16.mxu0 0
        %406 = vmatpush1.bf16.msra.mxu0 0
        %407 = vmatprep.subr.bf16.mxu0 0
        %408 = vmatpush1.bf16.msra.mxu0 0
        %409 = vmatprep.subr.bf16.mxu0 0
        %410 = vmatpush1.bf16.msra.mxu0 0
        %411 = vmatprep.subr.bf16.mxu0 0
        %412 = vmatpush1.bf16.msra.mxu0 0
        %413 = vmatprep.subr.bf16.mxu0 0
        %414 = vmatpush1.bf16.msra.mxu0 0
        %415 = vmatprep.subr.bf16.mxu0 0
        %416 = vmatpush1.bf16.msra.mxu0 0
        %417 = vmatprep.subr.bf16.mxu0 0
        %418 = vmatpush1.bf16.msra.mxu0 0
        %419 = vmatprep.subr.bf16.mxu0 0
        %420 = vmatpush1.bf16.msra.mxu0 0
        %421 = vmatprep.subr.bf16.mxu0 0
        %422 = vmatpush1.bf16.msra.mxu0 0
        %423 = vmatprep.mubr.bf16.mxu0 0
        %424 = vmatmul.mubr.bf16.gmra.mrb[0].mxu0 %v386
        %v425 = vpop.f32.mrb[0].mxu0
        %v426 = vadd.f32 0.0, %v425
        %v427 = vpop.f32.mrb[0].mxu0
        %v428 = vpop.f32.mrb[0].mxu0
        %v429 = vadd.f32 0.0, %v428
        %v430 = vpop.f32.mrb[0].mxu0
        %431 = vmatprep.mubr.bf16.mxu0 0
        %432 = vmatmul.mubr.bf16.gmra.mrb[0].mxu0 %v389
        %v433 = vpop.f32.mrb[0].mxu0
        %v434 = vadd.f32 0.0, %v433
        %v435 = vpop.f32.mrb[0].mxu0
        %v436 = vpop.f32.mrb[0].mxu0
        %v437 = vadd.f32 0.0, %v436
        %v438 = vpop.f32.mrb[0].mxu0
        %439 = vdwg.mxu0
        %v440 = vld [vmem:[%s305] sm:$0xff]
        %v441 = vld [vmem:[%s305 + $0x8] sm:$0xff]
        %v442 = vld [vmem:[%s305 + $0x10] sm:$0xff]
        %v443 = vld [vmem:[%s305 + $0x18] sm:$0xff]
        %444 = vadd.xlane.f32.xlu0 %v426
        %v445 = vpop.xlane.xlu0 %444
        %446 = vadd.xlane.f32.xlu0 %v429
        %v447 = vpop.xlane.xlu0 %446
        %448 = vadd.xlane.f32.xlu0 %v434
        %v449 = vpop.xlane.xlu0 %448
        %450 = vadd.xlane.f32.xlu0 %v437
        %v451 = vpop.xlane.xlu0 %450
        %v452 = vadd.f32 %v440, %v445
        %v453 = vadd.f32 %v441, %v447
        %v454 = vadd.f32 %v442, %v449
        %v455 = vadd.f32 %v443, %v451
        %vm456 = vcmask 7168
        %457 = vst.msk [vmem:[%s305] sm:$0xff] %vm456, %v452
        %458 = vst.msk [vmem:[%s305 + $0x8] sm:$0xff] %vm456, %v453
        %459 = vst.msk [vmem:[%s305 + $0x10] sm:$0xff] %vm456, %v454
        %460 = vst.msk [vmem:[%s305 + $0x18] sm:$0xff] %vm456, %v455
        %v461 = vld [vmem:[%s312] sm:$0xff]
        %v462 = vld [vmem:[%s312 + $0x8] sm:$0xff]
        %v463 = vld [vmem:[%s312 + $0x10] sm:$0xff]
        %v464 = vld [vmem:[%s312 + $0x18] sm:$0xff]
        %v465 = vmul.f32 %v426, %v426
        %v466 = vmul.f32 %v429, %v429
        %v467 = vmul.f32 %v434, %v434
        %v468 = vmul.f32 %v437, %v437
        %469 = vadd.xlane.f32.xlu0 %v465
        %v470 = vpop.xlane.xlu0 %469
        %471 = vadd.xlane.f32.xlu0 %v466
        %v472 = vpop.xlane.xlu0 %471
        %473 = vadd.xlane.f32.xlu0 %v467
        %v474 = vpop.xlane.xlu0 %473
        %475 = vadd.xlane.f32.xlu0 %v468
        %v476 = vpop.xlane.xlu0 %475
        %v477 = vadd.f32 %v461, %v470
        %v478 = vadd.f32 %v462, %v472
        %v479 = vadd.f32 %v463, %v474
        %v480 = vadd.f32 %v464, %v476
        %481 = vst.msk [vmem:[%s312] sm:$0xff] %vm456, %v477
        %482 = vst.msk [vmem:[%s312 + $0x8] sm:$0xff] %vm456, %v478
        %483 = vst.msk [vmem:[%s312 + $0x10] sm:$0xff] %vm456, %v479
        %484 = vst.msk [vmem:[%s312 + $0x18] sm:$0xff] %vm456, %v480
        %s485 = sand.u32 %s139, 1
        %s486 = scalar_lea.sflag [#allocation4], %s485
        %s487 = sand.u32 %s139, 1
        %s488 = smul.addr %s487, 32
        %s489 = scalar_lea.vmem [#allocation10], %s488
        %s490 = sand.u32 %s165, 1
        %s491 = scalar_lea.sflag [#allocation12], %s490
        %s492 = sand.u32 %s165, 1
        %s493 = smul.addr %s492, 32
        %s494 = scalar_lea.vmem [#allocation11], %s493
        // Predicated region
        $region57: #{resnet_block_conv1d.4} parent=35 // pred_check
          %p495 = pneg %p149
        $region58: #{resnet_block_conv1d.4} parent=35 // pred_check_branch
          %497 = sbr.rel (%p495) target = $region60
        $region59: #{resnet_block_conv1d.4} parent=35 // pred_region
          %s499 = ssub.s32 512, 512
          %500 = vsyncadd %s486, %s499
          %s501 = smul.addr %s32, 4
          %s502 = smul.addr %s501, 128
          %s503 = scalar_lea.hbm %s4, %s502
          %s504 = sshll.u32 %s489, 4
          %s505 = int_to_ptr.vmem [resolvable:$true] %s504
          %510 = dma.vmem_to_hbm [thread:$0]  %s505, 512, %s503, %s486, 128, 128, 8
        $region60: #{resnet_block_conv1d.4} parent=35 // pred_fallthru
          _
        // Predicated region
        $region61: #{resnet_block_conv1d.4} parent=35 // pred_check
          %p511 = pneg %p175
        $region62: #{resnet_block_conv1d.4} parent=35 // pred_check_branch
          %513 = sbr.rel (%p511) target = $region64
        $region63: #{resnet_block_conv1d.4} parent=35 // pred_region
          %s515 = ssub.s32 512, 512
          %516 = vsyncadd %s491, %s515
          %s517 = smul.addr %s32, 4
          %s518 = smul.addr %s517, 128
          %s519 = scalar_lea.hbm %s5, %s518
          %s520 = sshll.u32 %s494, 4
          %s521 = int_to_ptr.vmem [resolvable:$true] %s520
          %526 = dma.vmem_to_hbm [thread:$0]  %s521, 512, %s519, %s491, 128, 128, 8
        $region64: #{resnet_block_conv1d.4} parent=35 // pred_fallthru
          _
      $region36: #{resnet_block_conv1d.4} parent=5 // pred_fallthru
        _
      %p527 = scmp.le.s32.totalorder 2, %s23
      // Predicated region
      $region65: #{resnet_block_conv1d.4} parent=5 // pred_check
        %p528 = pneg %p527
      $region66: #{resnet_block_conv1d.4} parent=5 // pred_check_branch
        %530 = sbr.rel (%p528) target = $region68
      $region67: #{resnet_block_conv1d.4} parent=5 // pred_region
        %s531 = ssub.s32 %s23, 2
        // Predicated region
        $region69: #{resnet_block_conv1d.4} parent=67 // pred_check
          %p532 = pneg %p155
        $region70: #{resnet_block_conv1d.4} parent=67 // pred_check_branch
          %534 = sbr.rel (%p532) target = $region72
        $region71: #{resnet_block_conv1d.4} parent=67 // pred_region
          %s535 = sand.u32 %s140, 1
          %s536 = scalar_lea.sflag [#allocation4], %s535
          %s537 = sand.u32 %s140, 1
          %s538 = smul.addr %s537, 32
          %s539 = scalar_lea.vmem [#allocation10], %s538
          %540 = dma.done %s536, 512
        $region72: #{resnet_block_conv1d.4} parent=67 // pred_fallthru
          _
        // Predicated region
        $region73: #{resnet_block_conv1d.4} parent=67 // pred_check
          %p541 = pneg %p181
        $region74: #{resnet_block_conv1d.4} parent=67 // pred_check_branch
          %543 = sbr.rel (%p541) target = $region76
        $region75: #{resnet_block_conv1d.4} parent=67 // pred_region
          %s544 = sand.u32 %s166, 1
          %s545 = scalar_lea.sflag [#allocation12], %s544
          %s546 = sand.u32 %s166, 1
          %s547 = smul.addr %s546, 32
          %s548 = scalar_lea.vmem [#allocation11], %s547
          %549 = dma.done %s545, 512
        $region76: #{resnet_block_conv1d.4} parent=67 // pred_fallthru
          _
      $region68: #{resnet_block_conv1d.4} parent=5 // pred_fallthru
        _
    $region6: #{resnet_block_conv1d.4} parent=1 // loop_footer
      %s27 = sadd.s32 1, %s23
    $region7: #{resnet_block_conv1d.4} parent=1 // loop_footer_branch
      %22 = sbr.rel target = $region3
    $region8: #{resnet_block_conv1d.4} parent=1 // loop_exit
      _
    %550 = vsyncpa [#allocation3], 1
    %s551 = scalar_lea.sflag [#allocation3], 1
    %552 = vsyncpa %s551, 1
    %553 = vsyncpa [#allocation6], 1
    %554 = vsyncpa [#allocation9], 1
    %555 = vsyncpa [#allocation4], 1
    %s556 = scalar_lea.sflag [#allocation4], 1
    %557 = vsyncpa %s556, 1
    %558 = vsyncpa [#allocation12], 1
    %s559 = scalar_lea.sflag [#allocation12], 1
    %560 = vsyncpa %s559, 1

// kernel: resnet_block_conv1d.5
$region0: #{resnet_block_conv1d.5}
  #allocation0 [shape = 'u32[]', space=smem, size = 0x4, offset = 0x4, fixed_abs, tag = 'smem constant byte address 0x4 - core index']
  #allocation1 [shape = 'u32[144,128]{1,0:T(1,128)}', space=vmem, size = 0x12000, scoped, tag = 'internal scratch']
  %s0 = inlined_call_operand.hbm [shape: f32[2,16,128], index: 0, kind: input, shape index: {}]
  %s1 = inlined_call_operand.hbm [shape: f32[2,8,128], index: 1, kind: input, shape index: {}]
  %s2 = inlined_call_operand.hbm [shape: f32[16,1], index: 2, kind: input, shape index: {}]
  %s3 = inlined_call_operand.hbm [shape: f32[16,1], index: 3, kind: input, shape index: {}]
  %s4 = inlined_call_operand.hbm [shape: bf16[32,16], index: 4, kind: input, shape index: {}]
  %s5 = inlined_call_operand.hbm [shape: f32[32,1], index: 5, kind: input, shape index: {}]
  %s6 = inlined_call_operand.hbm [shape: bf16[24,32], index: 6, kind: input, shape index: {}]
  %s7 = inlined_call_operand.hbm [shape: bf16[24,8], index: 7, kind: input, shape index: {}]
  %s8 = inlined_call_operand.hbm [shape: bf16[24,16], index: 8, kind: input, shape index: {}]
  %s9 = inlined_call_operand.hbm [shape: f32[24,1], index: 9, kind: input, shape index: {}]
  %s10 = inlined_call_operand.hbm [shape: f32[2,24,128], index: 10, kind: output, shape index: {}]
  %s11 = sld [smem:[#allocation0]]
  $region113: #{resnet_block_conv1d.5} parent=0
    _
  %s13 = ssub.s32 1, %s11
  %s14 = scalar_select 0, %s13, %s11
  $region1: #{resnet_block_conv1d.5} parent=0
    #allocation2 [shape = 'u8[16384]{0}', space=vmem, size = 0x4000, scoped, tag = 'input window, operand 0']
    #allocation3 [shape = 's32[2]{0}', space=sflag, size = 0x8, scoped, tag = 'scoped memory for resnet_block_conv1d.5']
    #allocation4 [shape = 's32[2]{0}', space=sflag, size = 0x8, scoped, tag = 'scoped memory for resnet_block_conv1d.5']
    #allocation5 [shape = 'u8[8192]{0}', space=vmem, size = 0x2000, scoped, tag = 'input window, operand 1']
    #allocation6 [shape = 's32[2]{0}', space=sflag, size = 0x8, scoped, tag = 'scoped memory for resnet_block_conv1d.5']
    #allocation7 [shape = 'u8[8192]{0}', space=vmem, size = 0x2000, scoped, tag = 'input window, operand 2, single buffered']
    #allocation8 [shape = 'u8[8192]{0}', space=vmem, size = 0x2000, scoped, tag = 'input window, operand 3, single buffered']
    #allocation9 [shape = 's32[1]{0}', space=sflag, size = 0x4, scoped, tag = 'scoped memory for resnet_block_conv1d.5']
    #allocation10 [shape = 'u8[8192]{0}', space=vmem, size = 0x2000, scoped, tag = 'input window, operand 4, single buffered']
    #allocation11 [shape = 'u8[16384]{0}', space=vmem, size = 0x4000, scoped, tag = 'input window, operand 5, single buffered']
    #allocation12 [shape = 's32[1]{0}', space=sflag, size = 0x4, scoped, tag = 'scoped memory for resnet_block_conv1d.5']
    #allocation13 [shape = 'u8[6144]{0}', space=vmem, size = 0x1800, scoped, tag = 'input window, operand 6, single buffered']
    #allocation14 [shape = 'u8[6144]{0}', space=vmem, size = 0x1800, scoped, tag = 'input window, operand 7, single buffered']
    #allocation15 [shape = 's32[1]{0}', space=sflag, size = 0x4, scoped, tag = 'scoped memory for resnet_block_conv1d.5']
    #allocation16 [shape = 'u8[6144]{0}', space=vmem, size = 0x1800, scoped, tag = 'input window, operand 8, single buffered']
    #allocation17 [shape = 'u8[12288]{0}', space=vmem, size = 0x3000, scoped, tag = 'input window, operand 9, single buffered']
    #allocation18 [shape = 's32[1]{0}', space=sflag, size = 0x4, scoped, tag = 'scoped memory for resnet_block_conv1d.5']
    #allocation19 [shape = 'u8[24576]{0}', space=vmem, size = 0x6000, scoped, tag = 'output window, operand 0']
    %15 = vsyncpa [#allocation3], 0
    %s16 = scalar_lea.sflag [#allocation3], 1
    %17 = vsyncpa %s16, 0
    %18 = vsyncpa [#allocation6], 0
    %s19 = scalar_lea.sflag [#allocation6], 1
    %20 = vsyncpa %s19, 0
    %21 = vsyncpa [#allocation9], 0
    %22 = vsyncpa [#allocation12], 0
    %23 = vsyncpa [#allocation15], 0
    %24 = vsyncpa [#allocation18], 0
    %25 = vsyncpa [#allocation4], 0
    %s26 = scalar_lea.sflag [#allocation4], 1
    %27 = vsyncpa %s26, 0
    loop: start=0, step=1, limit=4
    $region2: #{resnet_block_conv1d.5} parent=1 // loop_pre_header
      _
    $region3: #{resnet_block_conv1d.5} parent=1 // loop_header
      %s29 = sphi 0, %s33
      %p30 = scmp.ge.s32.totalorder %s29, 4
      %s36 = sphi 0, %s48
      %s37 = sphi 0, %s44
      %s38 = sphi 0, %s36
      %s39 = sphi 0, %s37
      %s40 = sphi 0, %s38
      %s41 = sphi 0, %s39
      %s53 = sphi 0, %s55
      %s56 = sphi 0, %s53
      %s57 = sphi 0, %s56
      %s73 = sphi 0, %s57
      %s81 = sphi 0, %s83
      %s84 = sphi 0, %s81
      %s85 = sphi 0, %s84
      %s101 = sphi 0, %s85
      %s105 = sphi 0, %s105
      %s107 = sphi 0, %s105
      %s108 = sphi 0, %s107
      %s122 = sphi 0, %s108
      %s126 = sphi 0, %s126
      %s128 = sphi 0, %s126
      %s129 = sphi 0, %s128
      %s143 = sphi 0, %s129
      %s147 = sphi 0, %s147
      %s149 = sphi 0, %s147
      %s150 = sphi 0, %s149
      %s164 = sphi 0, %s150
      %s168 = sphi 0, %s168
      %s170 = sphi 0, %s168
      %s171 = sphi 0, %s170
      %s185 = sphi 0, %s171
      %s189 = sphi 0, %s189
      %s191 = sphi 0, %s189
      %s192 = sphi 0, %s191
      %s206 = sphi 0, %s192
      %s210 = sphi 0, %s210
      %s212 = sphi 0, %s210
      %s213 = sphi 0, %s212
      %s227 = sphi 0, %s213
      %s231 = sphi 0, %s231
      %s233 = sphi 0, %s231
      %s234 = sphi 0, %s233
      %s248 = sphi 0, %s234
      %s252 = sphi 0, %s252
      %s254 = sphi 0, %s252
      %s255 = sphi 0, %s254
      %s269 = sphi 0, %s255
      %s277 = sphi 0, %s279
      %s280 = sphi 0, %s277
      %s281 = sphi 0, %s280
      %s297 = sphi 0, %s281
    $region4: #{resnet_block_conv1d.5} parent=1 // loop_header_branch
      %32 = sbr.rel (%p30) target = $region8
    $region5: #{resnet_block_conv1d.5} parent=1 // loop_body
      %s34 = ssub.s32 %s29, 1
      %s35 = ssub.s32 %s29, 2
      %s42 = sadd.s32 1, %s37
      %p43 = scmp.ge.s32.totalorder %s42, 1
      %s44 = scalar_select %p43, 0, %s42
      %s45 = sadd.s32 1, %s36
      %s46 = scalar_select %p43, %s45, %s36
      %p47 = scmp.ge.s32.totalorder %s46, 2
      %s48 = scalar_select %p47, 0, %s46
      %s49 = ssub.s32 %s36, %s48
      %s50 = ssub.s32 %s37, %s44
      %s51 = sor.u32 %s49, %s50
      %p52 = scmp.eq.s32.totalorder %s51, 0
      %s54 = sadd.s32 %s53, 1
      %s55 = scalar_select %p52, %s53, %s54
      %p58 = pneg %p52
      %p59 = scmp.eq.s32.totalorder %s29, 1
      %p60 = por %p58, %p59
      %p61 = scmp.ne.s32.totalorder %s53, %s56
      %p62 = scmp.eq.s32.totalorder %s29, 0
      %p63 = por %p61, %p62
      %p64 = scmp.ne.s32.totalorder %s53, %s56
      %p65 = scmp.eq.s32.totalorder %s34, 1
      %p66 = por %p64, %p65
      %p67 = scmp.ne.s32.totalorder %s56, %s57
      %p68 = scmp.eq.s32.totalorder %s34, 0
      %p69 = por %p67, %p68
      %p70 = scmp.ne.s32.totalorder %s56, %s57
      %p71 = scmp.eq.s32.totalorder %s35, 1
      %p72 = por %p70, %p71
      %p74 = scmp.ne.s32.totalorder %s57, %s73
      %p75 = scmp.eq.s32.totalorder %s35, 0
      %p76 = por %p74, %p75
      %s77 = ssub.s32 %s36, %s48
      %s78 = ssub.s32 %s37, %s44
      %s79 = sor.u32 %s77, %s78
      %p80 = scmp.eq.s32.totalorder %s79, 0
      %s82 = sadd.s32 %s81, 1
      %s83 = scalar_select %p80, %s81, %s82
      %p86 = pneg %p80
      %p87 = scmp.eq.s32.totalorder %s29, 1
      %p88 = por %p86, %p87
      %p89 = scmp.ne.s32.totalorder %s81, %s84
      %p90 = scmp.eq.s32.totalorder %s29, 0
      %p91 = por %p89, %p90
      %p92 = scmp.ne.s32.totalorder %s81, %s84
      %p93 = scmp.eq.s32.totalorder %s34, 1
      %p94 = por %p92, %p93
      %p95 = scmp.ne.s32.totalorder %s84, %s85
      %p96 = scmp.eq.s32.totalorder %s34, 0
      %p97 = por %p95, %p96
      %p98 = scmp.ne.s32.totalorder %s84, %s85
      %p99 = scmp.eq.s32.totalorder %s35, 1
      %p100 = por %p98, %p99
      %p102 = scmp.ne.s32.totalorder %s85, %s101
      %p103 = scmp.eq.s32.totalorder %s35, 0
      %p104 = por %p102, %p103
      %s106 = sadd.s32 %s105, 1
      %p109 = scmp.eq.s32.totalorder %s29, 1
      %p110 = scmp.ne.s32.totalorder %s105, %s107
      %p111 = scmp.eq.s32.totalorder %s29, 0
      %p112 = por %p110, %p111
      %p113 = scmp.ne.s32.totalorder %s105, %s107
      %p114 = scmp.eq.s32.totalorder %s34, 1
      %p115 = por %p113, %p114
      %p116 = scmp.ne.s32.totalorder %s107, %s108
      %p117 = scmp.eq.s32.totalorder %s34, 0
      %p118 = por %p116, %p117
      %p119 = scmp.ne.s32.totalorder %s107, %s108
      %p120 = scmp.eq.s32.totalorder %s35, 1
      %p121 = por %p119, %p120
      %p123 = scmp.ne.s32.totalorder %s108, %s122
      %p124 = scmp.eq.s32.totalorder %s35, 0
      %p125 = por %p123, %p124
      %s127 = sadd.s32 %s126, 1
      %p130 = scmp.eq.s32.totalorder %s29, 1
      %p131 = scmp.ne.s32.totalorder %s126, %s128
      %p132 = scmp.eq.s32.totalorder %s29, 0
      %p133 = por %p131, %p132
      %p134 = scmp.ne.s32.totalorder %s126, %s128
      %p135 = scmp.eq.s32.totalorder %s34, 1
      %p136 = por %p134, %p135
      %p137 = scmp.ne.s32.totalorder %s128, %s129
      %p138 = scmp.eq.s32.totalorder %s34, 0
      %p139 = por %p137, %p138
      %p140 = scmp.ne.s32.totalorder %s128, %s129
      %p141 = scmp.eq.s32.totalorder %s35, 1
      %p142 = por %p140, %p141
      %p144 = scmp.ne.s32.totalorder %s129, %s143
      %p145 = scmp.eq.s32.totalorder %s35, 0
      %p146 = por %p144, %p145
      %s148 = sadd.s32 %s147, 1
      %p151 = scmp.eq.s32.totalorder %s29, 1
      %p152 = scmp.ne.s32.totalorder %s147, %s149
      %p153 = scmp.eq.s32.totalorder %s29, 0
      %p154 = por %p152, %p153
      %p155 = scmp.ne.s32.totalorder %s147, %s149
      %p156 = scmp.eq.s32.totalorder %s34, 1
      %p157 = por %p155, %p156
      %p158 = scmp.ne.s32.totalorder %s149, %s150
      %p159 = scmp.eq.s32.totalorder %s34, 0
      %p160 = por %p158, %p159
      %p161 = scmp.ne.s32.totalorder %s149, %s150
      %p162 = scmp.eq.s32.totalorder %s35, 1
      %p163 = por %p161, %p162
      %p165 = scmp.ne.s32.totalorder %s150, %s164
      %p166 = scmp.eq.s32.totalorder %s35, 0
      %p167 = por %p165, %p166
      %s169 = sadd.s32 %s168, 1
      %p172 = scmp.eq.s32.totalorder %s29, 1
      %p173 = scmp.ne.s32.totalorder %s168, %s170
      %p174 = scmp.eq.s32.totalorder %s29, 0
      %p175 = por %p173, %p174
      %p176 = scmp.ne.s32.totalorder %s168, %s170
      %p177 = scmp.eq.s32.totalorder %s34, 1
      %p178 = por %p176, %p177
      %p179 = scmp.ne.s32.totalorder %s170, %s171
      %p180 = scmp.eq.s32.totalorder %s34, 0
      %p181 = por %p179, %p180
      %p182 = scmp.ne.s32.totalorder %s170, %s171
      %p183 = scmp.eq.s32.totalorder %s35, 1
      %p184 = por %p182, %p183
      %p186 = scmp.ne.s32.totalorder %s171, %s185
      %p187 = scmp.eq.s32.totalorder %s35, 0
      %p188 = por %p186, %p187
      %s190 = sadd.s32 %s189, 1
      %p193 = scmp.eq.s32.totalorder %s29, 1
      %p194 = scmp.ne.s32.totalorder %s189, %s191
      %p195 = scmp.eq.s32.totalorder %s29, 0
      %p196 = por %p194, %p195
      %p197 = scmp.ne.s32.totalorder %s189, %s191
      %p198 = scmp.eq.s32.totalorder %s34, 1
      %p199 = por %p197, %p198
      %p200 = scmp.ne.s32.totalorder %s191, %s192
      %p201 = scmp.eq.s32.totalorder %s34, 0
      %p202 = por %p200, %p201
      %p203 = scmp.ne.s32.totalorder %s191, %s192
      %p204 = scmp.eq.s32.totalorder %s35, 1
      %p205 = por %p203, %p204
      %p207 = scmp.ne.s32.totalorder %s192, %s206
      %p208 = scmp.eq.s32.totalorder %s35, 0
      %p209 = por %p207, %p208
      %s211 = sadd.s32 %s210, 1
      %p214 = scmp.eq.s32.totalorder %s29, 1
      %p215 = scmp.ne.s32.totalorder %s210, %s212
      %p216 = scmp.eq.s32.totalorder %s29, 0
      %p217 = por %p215, %p216
      %p218 = scmp.ne.s32.totalorder %s210, %s212
      %p219 = scmp.eq.s32.totalorder %s34, 1
      %p220 = por %p218, %p219
      %p221 = scmp.ne.s32.totalorder %s212, %s213
      %p222 = scmp.eq.s32.totalorder %s34, 0
      %p223 = por %p221, %p222
      %p224 = scmp.ne.s32.totalorder %s212, %s213
      %p225 = scmp.eq.s32.totalorder %s35, 1
      %p226 = por %p224, %p225
      %p228 = scmp.ne.s32.totalorder %s213, %s227
      %p229 = scmp.eq.s32.totalorder %s35, 0
      %p230 = por %p228, %p229
      %s232 = sadd.s32 %s231, 1
      %p235 = scmp.eq.s32.totalorder %s29, 1
      %p236 = scmp.ne.s32.totalorder %s231, %s233
      %p237 = scmp.eq.s32.totalorder %s29, 0
      %p238 = por %p236, %p237
      %p239 = scmp.ne.s32.totalorder %s231, %s233
      %p240 = scmp.eq.s32.totalorder %s34, 1
      %p241 = por %p239, %p240
      %p242 = scmp.ne.s32.totalorder %s233, %s234
      %p243 = scmp.eq.s32.totalorder %s34, 0
      %p244 = por %p242, %p243
      %p245 = scmp.ne.s32.totalorder %s233, %s234
      %p246 = scmp.eq.s32.totalorder %s35, 1
      %p247 = por %p245, %p246
      %p249 = scmp.ne.s32.totalorder %s234, %s248
      %p250 = scmp.eq.s32.totalorder %s35, 0
      %p251 = por %p249, %p250
      %s253 = sadd.s32 %s252, 1
      %p256 = scmp.eq.s32.totalorder %s29, 1
      %p257 = scmp.ne.s32.totalorder %s252, %s254
      %p258 = scmp.eq.s32.totalorder %s29, 0
      %p259 = por %p257, %p258
      %p260 = scmp.ne.s32.totalorder %s252, %s254
      %p261 = scmp.eq.s32.totalorder %s34, 1
      %p262 = por %p260, %p261
      %p263 = scmp.ne.s32.totalorder %s254, %s255
      %p264 = scmp.eq.s32.totalorder %s34, 0
      %p265 = por %p263, %p264
      %p266 = scmp.ne.s32.totalorder %s254, %s255
      %p267 = scmp.eq.s32.totalorder %s35, 1
      %p268 = por %p266, %p267
      %p270 = scmp.ne.s32.totalorder %s255, %s269
      %p271 = scmp.eq.s32.totalorder %s35, 0
      %p272 = por %p270, %p271
      %s273 = ssub.s32 %s36, %s48
      %s274 = ssub.s32 %s37, %s44
      %s275 = sor.u32 %s273, %s274
      %p276 = scmp.eq.s32.totalorder %s275, 0
      %s278 = sadd.s32 %s277, 1
      %s279 = scalar_select %p276, %s277, %s278
      %p282 = pneg %p276
      %p283 = scmp.eq.s32.totalorder %s29, 1
      %p284 = por %p282, %p283
      %p285 = scmp.ne.s32.totalorder %s277, %s280
      %p286 = scmp.eq.s32.totalorder %s29, 0
      %p287 = por %p285, %p286
      %p288 = scmp.ne.s32.totalorder %s277, %s280
      %p289 = scmp.eq.s32.totalorder %s34, 1
      %p290 = por %p288, %p289
      %p291 = scmp.ne.s32.totalorder %s280, %s281
      %p292 = scmp.eq.s32.totalorder %s34, 0
      %p293 = por %p291, %p292
      %p294 = scmp.ne.s32.totalorder %s280, %s281
      %p295 = scmp.eq.s32.totalorder %s35, 1
      %p296 = por %p294, %p295
      %p298 = scmp.ne.s32.totalorder %s281, %s297
      %p299 = scmp.eq.s32.totalorder %s35, 0
      %p300 = por %p298, %p299
      %p301 = scmp.le.s32.totalorder 1, %s29
      %p302 = scmp.lt.s32.totalorder %s29, 3
      %p303 = pnand %p301, %p302
      %p304 = pneg %p303
      // Predicated region
      $region9: #{resnet_block_conv1d.5} parent=5 // pred_check
        _
      $region10: #{resnet_block_conv1d.5} parent=5 // pred_check_branch
        %306 = sbr.rel (%p303) target = $region12
      $region11: #{resnet_block_conv1d.5} parent=5 // pred_region
        %s307 = ssub.s32 %s29, 1
        // Predicated region
        $region13: #{resnet_block_conv1d.5} parent=11 // pred_check
          %p308 = pneg %p118
        $region14: #{resnet_block_conv1d.5} parent=11 // pred_check_branch
          %310 = sbr.rel (%p308) target = $region16
        $region15: #{resnet_block_conv1d.5} parent=11 // pred_region
          %s312 = ssub.s32 256, 256
          %313 = vsyncadd [#allocation6], %s312
          %s314 = sshll.u32 [#allocation7], 4
          %s315 = int_to_ptr.vmem [resolvable:$true] %s314
          %320 = dma.hbm_to_vmem [thread:$0]  %s2, 256, %s315, [#allocation6], 128, 128, 8
        $region16: #{resnet_block_conv1d.5} parent=11 // pred_fallthru
          _
        // Predicated region
        $region17: #{resnet_block_conv1d.5} parent=11 // pred_check
          %p321 = pneg %p139
        $region18: #{resnet_block_conv1d.5} parent=11 // pred_check_branch
          %323 = sbr.rel (%p321) target = $region20
        $region19: #{resnet_block_conv1d.5} parent=11 // pred_region
          %s325 = ssub.s32 256, 256
          %326 = vsyncadd [#allocation9], %s325
          %s327 = sshll.u32 [#allocation8], 4
          %s328 = int_to_ptr.vmem [resolvable:$true] %s327
          %333 = dma.hbm_to_vmem [thread:$0]  %s3, 256, %s328, [#allocation9], 128, 128, 8
        $region20: #{resnet_block_conv1d.5} parent=11 // pred_fallthru
          _
        // Predicated region
        $region21: #{resnet_block_conv1d.5} parent=11 // pred_check
          %p334 = pneg %p160
        $region22: #{resnet_block_conv1d.5} parent=11 // pred_check_branch
          %336 = sbr.rel (%p334) target = $region24
        $region23: #{resnet_block_conv1d.5} parent=11 // pred_region
          %s338 = ssub.s32 256, 256
          %339 = vsyncadd [#allocation9], %s338
          %s340 = sshll.u32 [#allocation10], 4
          %s341 = int_to_ptr.vmem [resolvable:$true] %s340
          %346 = dma.hbm_to_vmem [thread:$0]  %s4, 256, %s341, [#allocation9], 64, 64, 4
        $region24: #{resnet_block_conv1d.5} parent=11 // pred_fallthru
          _
        // Predicated region
        $region25: #{resnet_block_conv1d.5} parent=11 // pred_check
          %p347 = pneg %p181
        $region26: #{resnet_block_conv1d.5} parent=11 // pred_check_branch
          %349 = sbr.rel (%p347) target = $region28
        $region27: #{resnet_block_conv1d.5} parent=11 // pred_region
          %s351 = ssub.s32 512, 512
          %352 = vsyncadd [#allocation12], %s351
          %s353 = sshll.u32 [#allocation11], 4
          %s354 = int_to_ptr.vmem [resolvable:$true] %s353
          %359 = dma.hbm_to_vmem [thread:$0]  %s5, 512, %s354, [#allocation12], 128, 128, 8
        $region28: #{resnet_block_conv1d.5} parent=11 // pred_fallthru
          _
        // Predicated region
        $region29: #{resnet_block_conv1d.5} parent=11 // pred_check
          %p360 = pneg %p202
        $region30: #{resnet_block_conv1d.5} parent=11 // pred_check_branch
          %362 = sbr.rel (%p360) target = $region32
        $region31: #{resnet_block_conv1d.5} parent=11 // pred_region
          %s364 = ssub.s32 192, 192
          %365 = vsyncadd [#allocation12], %s364
          %s366 = sshll.u32 [#allocation13], 4
          %s367 = int_to_ptr.vmem [resolvable:$true] %s366
          %372 = dma.hbm_to_vmem [thread:$0]  %s6, 192, %s367, [#allocation12], 64, 64, 4
        $region32: #{resnet_block_conv1d.5} parent=11 // pred_fallthru
          _
        // Predicated region
        $region33: #{resnet_block_conv1d.5} parent=11 // pred_check
          %p373 = pneg %p223
        $region34: #{resnet_block_conv1d.5} parent=11 // pred_check_branch
          %375 = sbr.rel (%p373) target = $region36
        $region35: #{resnet_block_conv1d.5} parent=11 // pred_region
          %s377 = ssub.s32 192, 192
          %378 = vsyncadd [#allocation15], %s377
          %s379 = sshll.u32 [#allocation14], 4
          %s380 = int_to_ptr.vmem [resolvable:$true] %s379
          %385 = dma.hbm_to_vmem [thread:$0]  %s7, 192, %s380, [#allocation15], 64, 64, 4
        $region36: #{resnet_block_conv1d.5} parent=11 // pred_fallthru
          _
        // Predicated region
        $region37: #{resnet_block_conv1d.5} parent=11 // pred_check
          %p386 = pneg %p244
        $region38: #{resnet_block_conv1d.5} parent=11 // pred_check_branch
          %388 = sbr.rel (%p386) target = $region40
        $region39: #{resnet_block_conv1d.5} parent=11 // pred_region
          %s390 = ssub.s32 192, 192
          %391 = vsyncadd [#allocation15], %s390
          %s392 = sshll.u32 [#allocation16], 4
          %s393 = int_to_ptr.vmem [resolvable:$true] %s392
          %398 = dma.hbm_to_vmem [thread:$0]  %s8, 192, %s393, [#allocation15], 64, 64, 4
        $region40: #{resnet_block_conv1d.5} parent=11 // pred_fallthru
          _
        // Predicated region
        $region41: #{resnet_block_conv1d.5} parent=11 // pred_check
          %p399 = pneg %p265
        $region42: #{resnet_block_conv1d.5} parent=11 // pred_check_branch
          %401 = sbr.rel (%p399) target = $region44
        $region43: #{resnet_block_conv1d.5} parent=11 // pred_region
          %s403 = ssub.s32 384, 384
          %404 = vsyncadd [#allocation18], %s403
          %s405 = sshll.u32 [#allocation17], 4
          %s406 = int_to_ptr.vmem [resolvable:$true] %s405
          %411 = dma.hbm_to_vmem [thread:$0]  %s9, 384, %s406, [#allocation18], 128, 128, 8
        $region44: #{resnet_block_conv1d.5} parent=11 // pred_fallthru
          _
      $region12: #{resnet_block_conv1d.5} parent=5 // pred_fallthru
        _
      %p412 = scmp.lt.s32.totalorder %s29, 2
      // Predicated region
      $region45: #{resnet_block_conv1d.5} parent=5 // pred_check
        %p413 = pneg %p412
      $region46: #{resnet_block_conv1d.5} parent=5 // pred_check_branch
        %415 = sbr.rel (%p413) target = $region48
      $region47: #{resnet_block_conv1d.5} parent=5 // pred_region
        // Predicated region
        $region49: #{resnet_block_conv1d.5} parent=47 // pred_check
          %p416 = pneg %p63
        $region50: #{resnet_block_conv1d.5} parent=47 // pred_check_branch
          %418 = sbr.rel (%p416) target = $region52
        $region51: #{resnet_block_conv1d.5} parent=47 // pred_region
          %s419 = sand.u32 %s53, 1
          %s420 = scalar_lea.sflag [#allocation3], %s419
          %s421 = sand.u32 %s53, 1
          %s422 = smul.addr %s421, 16
          %s423 = scalar_lea.vmem [#allocation2], %s422
          %s425 = ssub.s32 256, 256
          %426 = vsyncadd %s420, %s425
          %s427 = smul.addr %s36, 2
          %s428 = sadd.s32 %s37, %s427
          %s429 = smul.addr %s428, 128
          %s430 = scalar_lea.hbm %s0, %s429
          %s431 = sshll.u32 %s423, 4
          %s432 = int_to_ptr.vmem [resolvable:$true] %s431
          %437 = dma.hbm_to_vmem [thread:$0]  %s430, 256, %s432, %s420, 128, 128, 8
        $region52: #{resnet_block_conv1d.5} parent=47 // pred_fallthru
          _
        // Predicated region
        $region53: #{resnet_block_conv1d.5} parent=47 // pred_check
          %p438 = pneg %p91
        $region54: #{resnet_block_conv1d.5} parent=47 // pred_check_branch
          %440 = sbr.rel (%p438) target = $region56
        $region55: #{resnet_block_conv1d.5} parent=47 // pred_region
          %s441 = sand.u32 %s29, 1
          %s442 = scalar_lea.sflag [#allocation6], %s441
          %s443 = sand.u32 %s81, 1
          %s444 = smul.addr %s443, 8
          %s445 = scalar_lea.vmem [#allocation5], %s444
          %s447 = ssub.s32 128, 128
          %448 = vsyncadd %s442, %s447
          %s449 = sadd.s32 %s37, %s36
          %s450 = smul.addr %s449, 128
          %s451 = scalar_lea.hbm %s1, %s450
          %s453 = sshll.u32 %s445, 4
          %s454 = int_to_ptr.vmem [resolvable:$true] %s453
          %456 = dma.hbm_to_vmem [thread:$0]  %s451, 128, %s454, %s442
        $region56: #{resnet_block_conv1d.5} parent=47 // pred_fallthru
          _
      $region48: #{resnet_block_conv1d.5} parent=5 // pred_fallthru
        _
      %p457 = scmp.le.s32.totalorder 1, %s29
      %p458 = scmp.lt.s32.totalorder %s29, 3
      %p459 = pnand %p457, %p458
      %p460 = pneg %p459
      // Predicated region
      $region57: #{resnet_block_conv1d.5} parent=5 // pred_check
        _
      $region58: #{resnet_block_conv1d.5} parent=5 // pred_check_branch
        %462 = sbr.rel (%p459) target = $region60
      $region59: #{resnet_block_conv1d.5} parent=5 // pred_region
        %s463 = ssub.s32 %s29, 1
        %s464 = sand.u32 %s56, 1
        %s465 = scalar_lea.sflag [#allocation3], %s464
        %s466 = sand.u32 %s56, 1
        %s467 = smul.addr %s466, 16
        %s468 = scalar_lea.vmem [#allocation2], %s467
        // Predicated region
        $region61: #{resnet_block_conv1d.5} parent=59 // pred_check
          %p469 = pneg %p69
        $region62: #{resnet_block_conv1d.5} parent=59 // pred_check_branch
          %471 = sbr.rel (%p469) target = $region64
        $region63: #{resnet_block_conv1d.5} parent=59 // pred_region
          %472 = dma.done %s465, 256
        $region64: #{resnet_block_conv1d.5} parent=59 // pred_fallthru
          _
        %s473 = sand.u32 %s34, 1
        %s474 = scalar_lea.sflag [#allocation6], %s473
        %s475 = sand.u32 %s84, 1
        %s476 = smul.addr %s475, 8
        %s477 = scalar_lea.vmem [#allocation5], %s476
        // Predicated region
        $region65: #{resnet_block_conv1d.5} parent=59 // pred_check
          %p478 = pneg %p97
        $region66: #{resnet_block_conv1d.5} parent=59 // pred_check_branch
          %480 = sbr.rel (%p478) target = $region68
        $region67: #{resnet_block_conv1d.5} parent=59 // pred_region
          %481 = dma.done %s474, 128
        $region68: #{resnet_block_conv1d.5} parent=59 // pred_fallthru
          _
        // Predicated region
        $region69: #{resnet_block_conv1d.5} parent=59 // pred_check
          %p482 = pneg %p118
        $region70: #{resnet_block_conv1d.5} parent=59 // pred_check_branch
          %484 = sbr.rel (%p482) target = $region72
        $region71: #{resnet_block_conv1d.5} parent=59 // pred_region
          %485 = dma.done [#allocation6], 256
        $region72: #{resnet_block_conv1d.5} parent=59 // pred_fallthru
          _
        // Predicated region
        $region73: #{resnet_block_conv1d.5} parent=59 // pred_check
          %p486 = pneg %p139
        $region74: #{resnet_block_conv1d.5} parent=59 // pred_check_branch
          %488 = sbr.rel (%p486) target = $region76
        $region75: #{resnet_block_conv1d.5} parent=59 // pred_region
          %489 = dma.done [#allocation9], 256
        $region76: #{resnet_block_conv1d.5} parent=59 // pred_fallthru
          _
        // Predicated region
        $region77: #{resnet_block_conv1d.5} parent=59 // pred_check
          %p490 = pneg %p160
        $region78: #{resnet_block_conv1d.5} parent=59 // pred_check_branch
          %492 = sbr.rel (%p490) target = $region80
        $region79: #{resnet_block_conv1d.5} parent=59 // pred_region
          %493 = dma.done [#allocation9], 256
        $region80: #{resnet_block_conv1d.5} parent=59 // pred_fallthru
          _
        // Predicated region
        $region81: #{resnet_block_conv1d.5} parent=59 // pred_check
          %p494 = pneg %p181
        $region82: #{resnet_block_conv1d.5} parent=59 // pred_check_branch
          %496 = sbr.rel (%p494) target = $region84
        $region83: #{resnet_block_conv1d.5} parent=59 // pred_region
          %497 = dma.done [#allocation12], 512
        $region84: #{resnet_block_conv1d.5} parent=59 // pred_fallthru
          _
        // Predicated region
        $region85: #{resnet_block_conv1d.5} parent=59 // pred_check
          %p498 = pneg %p202
        $region86: #{resnet_block_conv1d.5} parent=59 // pred_check_branch
          %500 = sbr.rel (%p498) target = $region88
        $region87: #{resnet_block_conv1d.5} parent=59 // pred_region
          %501 = dma.done [#allocation12], 192
        $region88: #{resnet_block_conv1d.5} parent=59 // pred_fallthru
          _
        // Predicated region
        $region89: #{resnet_block_conv1d.5} parent=59 // pred_check
          %p502 = pneg %p223
        $region90: #{resnet_block_conv1d.5} parent=59 // pred_check_branch
          %504 = sbr.rel (%p502) target = $region92
        $region91: #{resnet_block_conv1d.5} parent=59 // pred_region
          %505 = dma.done [#allocation15], 192
        $region92: #{resnet_block_conv1d.5} parent=59 // pred_fallthru
          _
        // Predicated region
        $region93: #{resnet_block_conv1d.5} parent=59 // pred_check
          %p506 = pneg %p244
        $region94: #{resnet_block_conv1d.5} parent=59 // pred_check_branch
          %508 = sbr.rel (%p506) target = $region96
        $region95: #{resnet_block_conv1d.5} parent=59 // pred_region
          %509 = dma.done [#allocation15], 192
        $region96: #{resnet_block_conv1d.5} parent=59 // pred_fallthru
          _
        // Predicated region
        $region97: #{resnet_block_conv1d.5} parent=59 // pred_check
          %p510 = pneg %p265
        $region98: #{resnet_block_conv1d.5} parent=59 // pred_check_branch
          %512 = sbr.rel (%p510) target = $region100
        $region99: #{resnet_block_conv1d.5} parent=59 // pred_region
          %513 = dma.done [#allocation18], 384
        $region100: #{resnet_block_conv1d.5} parent=59 // pred_fallthru
          _
        %s514 = sand.u32 %s56, 1
        %s515 = scalar_lea.sflag [#allocation3], %s514
        %s516 = sand.u32 %s56, 1
        %s517 = smul.addr %s516, 16
        %s518 = scalar_lea.vmem [#allocation2], %s517
        %p519 = pneg %p69
        %p520 = pneg %p66
        %s521 = sand.u32 %s34, 1
        %s522 = scalar_lea.sflag [#allocation6], %s521
        %s523 = sand.u32 %s84, 1
        %s524 = smul.addr %s523, 8
        %s525 = scalar_lea.vmem [#allocation5], %s524
        %p526 = pneg %p97
        %p527 = pneg %p94
        %p528 = pneg %p118
        %p529 = pneg %p115
        %p530 = pneg %p139
        %p531 = pneg %p136
        %p532 = pneg %p160
        %p533 = pneg %p157
        %p534 = pneg %p181
        %p535 = pneg %p178
        %p536 = pneg %p202
        %p537 = pneg %p199
        %p538 = pneg %p223
        %p539 = pneg %p220
        %p540 = pneg %p244
        %p541 = pneg %p241
        %p542 = pneg %p265
        %p543 = pneg %p262
        %p544 = pneg %p293
        %p545 = pneg %p290
        %s546 = sand.u32 %s280, 1
        %s547 = scalar_lea.sflag [#allocation4], %s546
        %s548 = sand.u32 %s280, 1
        %s549 = smul.addr %s548, 24
        %s550 = scalar_lea.vmem [#allocation19], %s549
        %v552 = vld [vmem:[%s468] sm:$0xff]
        %v553 = vld [vmem:[%s468 + $0x8] sm:$0xff]
        %v554 = vld [vmem:[#allocation7] sm:$0xff]
        %v555 = vld [vmem:[#allocation7 + $0x8] sm:$0xff]
        %557 = vset.pattern.permute.xlu0 0
        %558 = vperm.xlu0 %557, %v554
        %v559 = vpop.permute.xlu0 %558
        %562 = vset.pattern.permute.xlu0 0
        %563 = vperm.xlu0 %562, %v555
        %v564 = vpop.permute.xlu0 %563
        %v566 = vmul.f32 %v559, %v552
        %v567 = vmul.f32 %v564, %v553
        %v568 = vld [vmem:[#allocation8] sm:$0xff]
        %v569 = vld [vmem:[#allocation8 + $0x8] sm:$0xff]
        %571 = vset.pattern.permute.xlu0 0
        %572 = vperm.xlu0 %571, %v568
        %v573 = vpop.permute.xlu0 %572
        %576 = vset.pattern.permute.xlu0 0
        %577 = vperm.xlu0 %576, %v569
        %v578 = vpop.permute.xlu0 %577
        %v580 = vadd.f32 %v566, %v573
        %v581 = vadd.f32 %v567, %v578
        %v582 = vmax.f32 %v580, 0.0
        %v583 = vmax.f32 %v581, 0.0
        %v584 = vld [vmem:[#allocation10] sm:$0xf]
        %v585 = vld [vmem:[#allocation10 + $0x4] sm:$0xf]
        %v586 = vld [vmem:[#allocation10 + $0x8] sm:$0xf]
        %v587 = vld [vmem:[#allocation10 + $0xc] sm:$0xf]
        %v588 = vpack.c.bf16 %v583, %v582
        %v589 = vld [vmem:[#allocation11] sm:$0xff]
        %v590 = vld [vmem:[#allocation11 + $0x8] sm:$0xff]
        %v591 = vld [vmem:[#allocation11 + $0x10] sm:$0xff]
        %v592 = vld [vmem:[#allocation11 + $0x18] sm:$0xff]
        %594 = vset.pattern.permute.xlu0 0
        %595 = vperm.xlu0 %594, %v589
        %v596 = vpop.permute.xlu0 %595
        %599 = vset.pattern.permute.xlu0 0
        %600 = vperm.xlu0 %599, %v590
        %v601 = vpop.permute.xlu0 %600
        %604 = vset.pattern.permute.xlu0 0
        %605 = vperm.xlu0 %604, %v591
        %v606 = vpop.permute.xlu0 %605
        %609 = vset.pattern.permute.xlu0 0
        %610 = vperm.xlu0 %609, %v592
        %v611 = vpop.permute.xlu0 %610
        %v617 = vunpack.c.l.b16 %v584
        %v618 = vunpack.c.l.b16 %v585
        %v619 = vunpack.c.l.b16 %v586
        %v620 = vunpack.c.l.b16 %v587
        %v621 = vpack.c.b16 %v618, %v617
        %v622 = vpack.c.b16 %v620, %v619
        %vm623 = vcmask 130048
        %v625 = vsel %vm623, %v621, 0
        %v628 = vsel %vm623, %v622, 0
        %630 = vmatprep.subr.bf16.mxu0 0
        %631 = vmatpush1.bf16.msra.mxu0 %v588
        %632 = vmatprep.subr.bf16.mxu0 0
        %633 = vmatpush1.bf16.msra.mxu0 0
        %634 = vmatprep.subr.bf16.mxu0 0
        %635 = vmatpush1.bf16.msra.mxu0 0
        %636 = vmatprep.subr.bf16.mxu0 0
        %637 = vmatpush1.bf16.msra.mxu0 0
        %638 = vmatprep.subr.bf16.mxu0 0
        %639 = vmatpush1.bf16.msra.mxu0 0
        %640 = vmatprep.subr.bf16.mxu0 0
        %641 = vmatpush1.bf16.msra.mxu0 0
        %642 = vmatprep.subr.bf16.mxu0 0
        %643 = vmatpush1.bf16.msra.mxu0 0
        %644 = vmatprep.subr.bf16.mxu0 0
        %645 = vmatpush1.bf16.msra.mxu0 0
        %646 = vmatprep.subr.bf16.mxu0 0
        %647 = vmatpush1.bf16.msra.mxu0 0
        %648 = vmatprep.subr.bf16.mxu0 0
        %649 = vmatpush1.bf16.msra.mxu0 0
        %650 = vmatprep.subr.bf16.mxu0 0
        %651 = vmatpush1.bf16.msra.mxu0 0
        %652 = vmatprep.subr.bf16.mxu0 0
        %653 = vmatpush1.bf16.msra.mxu0 0
        %654 = vmatprep.subr.bf16.mxu0 0
        %655 = vmatpush1.bf16.msra.mxu0 0
        %656 = vmatprep.subr.bf16.mxu0 0
        %657 = vmatpush1.bf16.msra.mxu0 0
        %658 = vmatprep.subr.bf16.mxu0 0
        %659 = vmatpush1.bf16.msra.mxu0 0
        %660 = vmatprep.subr.bf16.mxu0 0
        %661 = vmatpush1.bf16.msra.mxu0 0
        %662 = vmatprep.mubr.bf16.mxu0 0
        %663 = vmatmul.mubr.bf16.gmra.mrb[0].mxu0 %v625
        %v664 = vpop.f32.mrb[0].mxu0
        %v665 = vadd.f32 %v596, %v664
        %v666 = vpop.f32.mrb[0].mxu0
        %v667 = vpop.f32.mrb[0].mxu0
        %v668 = vadd.f32 %v601, %v667
        %v669 = vpop.f32.mrb[0].mxu0
        %670 = vmatprep.mubr.bf16.mxu0 0
        %671 = vmatmul.mubr.bf16.gmra.mrb[0].mxu0 %v628
        %v672 = vpop.f32.mrb[0].mxu0
        %v673 = vadd.f32 %v606, %v672
        %v674 = vpop.f32.mrb[0].mxu0
        %v675 = vpop.f32.mrb[0].mxu0
        %v676 = vadd.f32 %v611, %v675
        %v677 = vpop.f32.mrb[0].mxu0
        %678 = vdwg.mxu0
        %v679 = vmax.f32 %v665, 0.0
        %v680 = vmax.f32 %v668, 0.0
        %v681 = vmax.f32 %v673, 0.0
        %v682 = vmax.f32 %v676, 0.0
        %v683 = vld [vmem:[#allocation13] sm:$0xf]
        %v684 = vld [vmem:[#allocation13 + $0x4] sm:$0xf]
        %v685 = vld [vmem:[#allocation13 + $0x8] sm:$0xf]
        %v686 = vpack.c.bf16 %v680, %v679
        %v687 = vpack.c.bf16 %v682, %v681
        %v688 = vld [vmem:[#allocation14] sm:$0xf]
        %v689 = vld [vmem:[#allocation14 + $0x4] sm:$0xf]
        %v690 = vld [vmem:[#allocation14 + $0x8] sm:$0xf]
        %v691 = vld [vmem:[%s477] sm:$0xff]
        %v692 = vpack.c.bf16 %v691, %v691
        %v696 = vunpack.c.l.b16 %v688
        %v697 = vunpack.c.l.b16 %v689
        %v698 = vunpack.c.l.b16 %v690
        %v699 = vpack.c.b16 %v697, %v696
        %v700 = vpack.c.b16 %v698, %v698
        %vm701 = vcmask 64512
        %v703 = vsel %vm701, %v699, 0
        %v706 = vsel %vm701, %v700, 0
        %vm708 = vcmask 1043456
        %v710 = vsel %vm708, %v692, 0
        %712 = vmatprep.subr.bf16.mxu0 0
        %713 = vmatpush1.bf16.msra.mxu0 %v710
        %714 = vmatprep.subr.bf16.mxu0 0
        %715 = vmatpush1.bf16.msra.mxu0 0
        %716 = vmatprep.subr.bf16.mxu0 0
        %717 = vmatpush1.bf16.msra.mxu0 0
        %718 = vmatprep.subr.bf16.mxu0 0
        %719 = vmatpush1.bf16.msra.mxu0 0
        %720 = vmatprep.subr.bf16.mxu0 0
        %721 = vmatpush1.bf16.msra.mxu0 0
        %722 = vmatprep.subr.bf16.mxu0 0
        %723 = vmatpush1.bf16.msra.mxu0 0
        %724 = vmatprep.subr.bf16.mxu0 0
        %725 = vmatpush1.bf16.msra.mxu0 0
        %726 = vmatprep.subr.bf16.mxu0 0
        %727 = vmatpush1.bf16.msra.mxu0 0
        %728 = vmatprep.subr.bf16.mxu0 0
        %729 = vmatpush1.bf16.msra.mxu0 0
        %730 = vmatprep.subr.bf16.mxu0 0
        %731 = vmatpush1.bf16.msra.mxu0 0
        %732 = vmatprep.subr.bf16.mxu0 0
        %733 = vmatpush1.bf16.msra.mxu0 0
        %734 = vmatprep.subr.bf16.mxu0 0
        %735 = vmatpush1.bf16.msra.mxu0 0
        %736 = vmatprep.subr.bf16.mxu0 0
        %737 = vmatpush1.bf16.msra.mxu0 0
        %738 = vmatprep.subr.bf16.mxu0 0
        %739 = vmatpush1.bf16.msra.mxu0 0
        %740 = vmatprep.subr.bf16.mxu0 0
        %741 = vmatpush1.bf16.msra.mxu0 0
        %742 = vmatprep.subr.bf16.mxu0 0
        %743 = vmatpush1.bf16.msra.mxu0 0
        %744 = vmatprep.mubr.bf16.mxu0 0
        %745 = vmatmul.mubr.bf16.gmra.mrb[0].mxu0 %v703
        %v746 = vpop.f32.mrb[0].mxu0
        %v747 = vadd.f32 0.0, %v746
        %v748 = vpop.f32.mrb[0].mxu0
        %v749 = vpop.f32.mrb[0].mxu0
        %v750 = vadd.f32 0.0, %v749
        %v751 = vpop.f32.mrb[0].mxu0
        %752 = vmatprep.mubr.bf16.mxu0 0
        %753 = vmatmul.mubr.bf16.gmra.mrb[0].mxu0 %v706
        %v754 = vpop.f32.mrb[0].mxu0
        %v755 = vadd.f32 0.0, %v754
        %v756 = vpop.f32.mrb[0].mxu0
        %v757 = vpop.f32.mrb[0].mxu0
        %v758 = vpop.f32.mrb[0].mxu0
        %759 = vdwg.mxu0
        %v763 = vunpack.c.l.b16 %v683
        %v764 = vunpack.c.l.b16 %v684
        %v765 = vunpack.c.l.b16 %v685
        %v766 = vpack.c.b16 %v764, %v763
        %v767 = vpack.c.b16 %v765, %v765
        %vm768 = vcmask 261120
        %v770 = vsel %vm768, %v766, 0
        %v773 = vsel %vm768, %v767, 0
        %775 = vmatprep.subr.bf16.mxu0 0
        %776 = vmatpush1.bf16.msra.mxu0 %v686
        %777 = vmatprep.subr.bf16.mxu0 0
        %778 = vmatpush1.bf16.msra.mxu0 %v687
        %779 = vmatprep.subr.bf16.mxu0 0
        %780 = vmatpush1.bf16.msra.mxu0 0
        %781 = vmatprep.subr.bf16.mxu0 0
        %782 = vmatpush1.bf16.msra.mxu0 0
        %783 = vmatprep.subr.bf16.mxu0 0
        %784 = vmatpush1.bf16.msra.mxu0 0
        %785 = vmatprep.subr.bf16.mxu0 0
        %786 = vmatpush1.bf16.msra.mxu0 0
        %787 = vmatprep.subr.bf16.mxu0 0
        %788 = vmatpush1.bf16.msra.mxu0 0
        %789 = vmatprep.subr.bf16.mxu0 0
        %790 = vmatpush1.bf16.msra.mxu0 0
        %791 = vmatprep.subr.bf16.mxu0 0
        %792 = vmatpush1.bf16.msra.mxu0 0
        %793 = vmatprep.subr.bf16.mxu0 0
        %794 = vmatpush1.bf16.msra.mxu0 0
        %795 = vmatprep.subr.bf16.mxu0 0
        %796 = vmatpush1.bf16.msra.mxu0 0
        %797 = vmatprep.subr.bf16.mxu0 0
        %798 = vmatpush1.bf16.msra.mxu0 0
        %799 = vmatprep.subr.bf16.mxu0 0
        %800 = vmatpush1.bf16.msra.mxu0 0
        %801 = vmatprep.subr.bf16.mxu0 0
        %802 = vmatpush1.bf16.msra.mxu0 0
        %803 = vmatprep.subr.bf16.mxu0 0
        %804 = vmatpush1.bf16.msra.mxu0 0
        %805 = vmatprep.subr.bf16.mxu0 0
        %806 = vmatpush1.bf16.msra.mxu0 0
        %807 = vmatprep.mubr.bf16.mxu0 0
        %808 = vmatmul.mubr.bf16.gmra.mrb[0].mxu0 %v770
        %v809 = vpop.f32.mrb[0].mxu0
        %v810 = vadd.f32 %v747, %v809
        %v811 = vpop.f32.mrb[0].mxu0
        %v812 = vpop.f32.mrb[0].mxu0
        %v813 = vadd.f32 %v750, %v812
        %v814 = vpop.f32.mrb[0].mxu0
        %815 = vmatprep.mubr.bf16.mxu0 0
        %816 = vmatmul.mubr.bf16.gmra.mrb[0].mxu0 %v773
        %v817 = vpop.f32.mrb[0].mxu0
        %v818 = vadd.f32 %v755, %v817
        %v819 = vpop.f32.mrb[0].mxu0
        %v820 = vpop.f32.mrb[0].mxu0
        %v821 = vpop.f32.mrb[0].mxu0
        %822 = vdwg.mxu0
        %v823 = vld [vmem:[#allocation16] sm:$0xf]
        %v824 = vld [vmem:[#allocation16 + $0x4] sm:$0xf]
        %v825 = vld [vmem:[#allocation16 + $0x8] sm:$0xf]
        %v826 = vpack.c.bf16 %v553, %v552
        %v830 = vunpack.c.l.b16 %v823
        %v831 = vunpack.c.l.b16 %v824
        %v832 = vunpack.c.l.b16 %v825
        %v833 = vpack.c.b16 %v831, %v830
        %v834 = vpack.c.b16 %v832, %v832
        %v836 = vsel %vm623, %v833, 0
        %v839 = vsel %vm623, %v834, 0
        %841 = vmatprep.subr.bf16.mxu0 0
        %842 = vmatpush1.bf16.msra.mxu0 %v826
        %843 = vmatprep.subr.bf16.mxu0 0
        %844 = vmatpush1.bf16.msra.mxu0 0
        %845 = vmatprep.subr.bf16.mxu0 0
        %846 = vmatpush1.bf16.msra.mxu0 0
        %847 = vmatprep.subr.bf16.mxu0 0
        %848 = vmatpush1.bf16.msra.mxu0 0
        %849 = vmatprep.subr.bf16.mxu0 0
        %850 = vmatpush1.bf16.msra.mxu0 0
        %851 = vmatprep.subr.bf16.mxu0 0
        %852 = vmatpush1.bf16.msra.mxu0 0
        %853 = vmatprep.subr.bf16.mxu0 0
        %854 = vmatpush1.bf16.msra.mxu0 0
        %855 = vmatprep.subr.bf16.mxu0 0
        %856 = vmatpush1.bf16.msra.mxu0 0
        %857 = vmatprep.subr.bf16.mxu0 0
        %858 = vmatpush1.bf16.msra.mxu0 0
        %859 = vmatprep.subr.bf16.mxu0 0
        %860 = vmatpush1.bf16.msra.mxu0 0
        %861 = vmatprep.subr.bf16.mxu0 0
        %862 = vmatpush1.bf16.msra.mxu0 0
        %863 = vmatprep.subr.bf16.mxu0 0
        %864 = vmatpush1.bf16.msra.mxu0 0
        %865 = vmatprep.subr.bf16.mxu0 0
        %866 = vmatpush1.bf16.msra.mxu0 0
        %867 = vmatprep.subr.bf16.mxu0 0
        %868 = vmatpush1.bf16.msra.mxu0 0
        %869 = vmatprep.subr.bf16.mxu0 0
        %870 = vmatpush1.bf16.msra.mxu0 0
        %871 = vmatprep.subr.bf16.mxu0 0
        %872 = vmatpush1.bf16.msra.mxu0 0
        %873 = vmatprep.mubr.bf16.mxu0 0
        %874 = vmatmul.mubr.bf16.gmra.mrb[0].mxu0 %v836
        %v875 = vpop.f32.mrb[0].mxu0
        %v876 = vadd.f32 0.0, %v875
        %v877 = vpop.f32.mrb[0].mxu0
        %v878 = vpop.f32.mrb[0].mxu0
        %v879 = vadd.f32 0.0, %v878
        %v880 = vpop.f32.mrb[0].mxu0
        %881 = vmatprep.mubr.bf16.mxu0 0
        %882 = vmatmul.mubr.bf16.gmra.mrb[0].mxu0 %v839
        %v883 = vpop.f32.mrb[0].mxu0
        %v884 = vadd.f32 0.0, %v883
        %v885 = vpop.f32.mrb[0].mxu0
        %v886 = vpop.f32.mrb[0].mxu0
        %v887 = vpop.f32.mrb[0].mxu0
        %888 = vdwg.mxu0
        %v889 = vadd.f32 %v810, %v876
        %v890 = vadd.f32 %v813, %v879
        %v891 = vadd.f32 %v818, %v884
        %v892 = vld [vmem:[#allocation17] sm:$0xff]
        %v893 = vld [vmem:[#allocation17 + $0x8] sm:$0xff]
        %v894 = vld [vmem:[#allocation17 + $0x10] sm:$0xff]
        %896 = vset.pattern.permute.xlu0 0
        %897 = vperm.xlu0 %896, %v892
        %v898 = vpop.permute.xlu0 %897
        %901 = vset.pattern.permute.xlu0 0
        %902 = vperm.xlu0 %901, %v893
        %v903 = vpop.permute.xlu0 %902
        %906 = vset.pattern.permute.xlu0 0
        %907 = vperm.xlu0 %906, %v894
        %v908 = vpop.permute.xlu0 %907
        %v910 = vadd.f32 %v889, %v898
        %v911 = vadd.f32 %v890, %v903
        %v912 = vadd.f32 %v891, %v908
        %913 = vst [vmem:[%s550] sm:$0xff] %v910
        %914 = vst [vmem:[%s550 + $0x8] sm:$0xff] %v911
        %915 = vst [vmem:[%s550 + $0x10] sm:$0xff] %v912
        %s916 = sand.u32 %s280, 1
        %s917 = scalar_lea.sflag [#allocation4], %s916
        %s918 = sand.u32 %s280, 1
        %s919 = smul.addr %s918, 24
        %s920 = scalar_lea.vmem [#allocation19], %s919
        // Predicated region
        $region101: #{resnet_block_conv1d.5} parent=59 // pred_check
          %p921 = pneg %p290
        $region102: #{resnet_block_conv1d.5} parent=59 // pred_check_branch
          %923 = sbr.rel (%p921) target = $region104
        $region103: #{resnet_block_conv1d.5} parent=59 // pred_region
          %s925 = ssub.s32 384, 384
          %926 = vsyncadd %s917, %s925
          %s927 = smul.addr %s38, 3
          %s928 = sadd.s32 %s39, %s927
          %s929 = smul.addr %s928, 128
          %s930 = scalar_lea.hbm %s10, %s929
          %s931 = sshll.u32 %s920, 4
          %s932 = int_to_ptr.vmem [resolvable:$true] %s931
          %937 = dma.vmem_to_hbm [thread:$0]  %s932, 384, %s930, %s917, 128, 128, 8
        $region104: #{resnet_block_conv1d.5} parent=59 // pred_fallthru
          _
      $region60: #{resnet_block_conv1d.5} parent=5 // pred_fallthru
        _
      %p938 = scmp.le.s32.totalorder 2, %s29
      // Predicated region
      $region105: #{resnet_block_conv1d.5} parent=5 // pred_check
        %p939 = pneg %p938
      $region106: #{resnet_block_conv1d.5} parent=5 // pred_check_branch
        %941 = sbr.rel (%p939) target = $region108
      $region107: #{resnet_block_conv1d.5} parent=5 // pred_region
        %s942 = ssub.s32 %s29, 2
        // Predicated region
        $region109: #{resnet_block_conv1d.5} parent=107 // pred_check
          %p943 = pneg %p296
        $region110: #{resnet_block_conv1d.5} parent=107 // pred_check_branch
          %945 = sbr.rel (%p943) target = $region112
        $region111: #{resnet_block_conv1d.5} parent=107 // pred_region
          %s946 = sand.u32 %s281, 1
          %s947 = scalar_lea.sflag [#allocation4], %s946
          %s948 = sand.u32 %s281, 1
          %s949 = smul.addr %s948, 24
          %s950 = scalar_lea.vmem [#allocation19], %s949
          %951 = dma.done %s947, 384
        $region112: #{resnet_block_conv1d.5} parent=107 // pred_fallthru
          _
      $region108: #{resnet_block_conv1d.5} parent=5 // pred_fallthru
        _
    $region6: #{resnet_block_conv1d.5} parent=1 // loop_footer
      %s33 = sadd.s32 1, %s29
    $region7: #{resnet_block_conv1d.5} parent=1 // loop_footer_branch
      %28 = sbr.rel target = $region3
    $region8: #{resnet_block_conv1d.5} parent=1 // loop_exit
      _
    %952 = vsyncpa [#allocation3], 1
    %s953 = scalar_lea.sflag [#allocation3], 1
    %954 = vsyncpa %s953, 1
    %955 = vsyncpa [#allocation6], 1
    %s956 = scalar_lea.sflag [#allocation6], 1
    %957 = vsyncpa %s956, 1
    %958 = vsyncpa [#allocation9], 1
    %959 = vsyncpa [#allocation12], 1
    %960 = vsyncpa [#allocation15], 1
    %961 = vsyncpa [#allocation18], 1
    %962 = vsyncpa [#allocation4], 1
    %s963 = scalar_lea.sflag [#allocation4], 1
    %964 = vsyncpa %s963, 1

</llo_original>
